<compile_context>
chip_gen: v5e
topology: v5e:2x2
jax: 0.10.0
libtpu: 0.0.40
codegen_flags: <defaults>
</compile_context>

<pallas_src>
import numpy as np
import jax
import jax.numpy as jnp
from jax.experimental import pallas as pl
from jax.experimental.pallas import tpu as pltpu

HIGHEST = jax.lax.Precision.HIGHEST


def _round_up(x, m):
    return ((x + m - 1) // m) * m


def _vmem_budget_bytes():
    """Generation-aware VMEM budget (~102 MiB on v5e/v6e, ~51 MiB on v7x)."""
    try:
        cap = int(pltpu.get_tpu_info().vmem_capacity_bytes)
    except Exception:
        cap = 64 * 1024 * 1024          # conservative fallback, safe on all gens
    return max(32 * 1024 * 1024, int(cap * 0.80))


def _const_spec(block_shape, index_map):
    """Constant-index resident block; single-buffered to save VMEM."""
    try:
        return pl.BlockSpec(block_shape, index_map, pipeline_mode=pl.Buffered(1))
    except (TypeError, AttributeError):    # older BlockSpec without pipeline_mode
        return pl.BlockSpec(block_shape, index_map)


def _choose_time_chunk(T, Bp, Dp, Hp, budget, requested=32):
    """Largest time chunk (multiple of 8, <= requested) fitting the VMEM budget."""
    G = 4 * Hp
    fixed = (Dp * G * 2 + Hp * G * 2       # resident bf16 W_ih^T, W_hh^T (1-buffered)
             + G * 4                        # bias
             + Bp * Hp * (2 + 4) + Bp * 4)  # h (bf16) + c (f32) state + ilens
    best = 8
    for tc in (8, 16, 24, 32, 48, 64, 96, 128):
        if tc > max(8, requested):
            break
        per_chunk = (2 * tc * Bp * Dp * 2   # x chunk (bf16, double-buffered)
                     + tc * Bp * G * 4      # gates_x scratch (f32)
                     + 2 * tc * Bp * Hp * 2)  # h_out chunk (bf16, double-buffered)
        if fixed + per_chunk <= int(budget * 0.85):
            best = tc
    best = min(best, _round_up(max(T, 1), 8))
    return max(8, _round_up(best, 8))


def _pick_col_tile(Cp, K, budget):
    """Largest multiple-of-128 divisor of Cp whose (K, tile_c) bf16 weight tile
    (double-buffered when streamed) fits a fraction of the VMEM budget."""
    cap = int(budget * 0.40)
    best, d = 128, 128
    while d <= Cp:
        if Cp % d == 0 and 2 * K * d * 2 <= cap:
            best = d
        d += 128
    return best


def _pick_time_tile(T_pad, Bp, Hp, tile_c, budget):
    """Largest multiple-of-8 divisor of T_pad whose head x/out blocks fit VMEM."""
    per_row = 2 * Hp * 2 + 2 * tile_c * 4   # bf16 x (2-buf) + f32 out (2-buf)
    max_rows = max(8 * Bp, int(budget * 0.45) // max(per_row, 1))
    best, d = 8, 8
    while d <= T_pad:
        if T_pad % d == 0 and d * Bp <= max_rows:
            best = d
        d += 8
    return best


# -----------------------------------------------------------------------------
# Kernel 1: fused input-projection + recurrence.
#   grid = (nb, time_chunks); per grid step:
#     gates_x = (TC*B, Dp) @ (Dp, 4Hp) + b   -> VMEM scratch (no HBM round-trip)
#     then TC serial LSTM steps (h bf16 / c f32 state in VMEM).
#   PyTorch gate order i, f, g, o.  pad_packed_sequence masking fused into the
#   output write (state keeps updating past the length; only outputs exposed).
# -----------------------------------------------------------------------------
def lstm_fused_kernel(x_ref, wihT_ref, whhT_ref, b_ref, ilens_ref,
                      h_out_ref, gx_sc, h_sc, c_sc):
    tc_idx = pl.program_id(1)

    @pl.when(tc_idx == 0)
    def _():
        h_sc[...] = jnp.zeros_like(h_sc)
        c_sc[...] = jnp.zeros_like(c_sc)

    TC, BB, Dp = x_ref.shape
    Hp = h_sc.shape[-1]
    G = 4 * Hp

    # --- chunk input projection: one big parallel MXU matmul per grid step ---
    x_flat = x_ref[...].reshape(TC * BB, Dp)
    gx = jnp.dot(x_flat, wihT_ref[...], preferred_element_type=jnp.float32)
    gx_sc[...] = (gx + b_ref[...]).reshape(TC, BB, G)

    whh = whhT_ref[...]                     # (Hp, 4Hp) bf16, resident
    lens = ilens_ref[...]                   # (BB, 1) int32

    def step_fn(s, carry):
        gates = gx_sc[s] + jnp.dot(h_sc[...], whh,
                                   preferred_element_type=jnp.float32)
        i = jax.nn.sigmoid(gates[:, 0 * Hp:1 * Hp])
        f = jax.nn.sigmoid(gates[:, 1 * Hp:2 * Hp])
        g = jnp.tanh(gates[:, 2 * Hp:3 * Hp])
        o = jax.nn.sigmoid(gates[:, 3 * Hp:4 * Hp])
        c_new = f * c_sc[...] + i * g
        h_new = (o * jnp.tanh(c_new)).astype(jnp.bfloat16)
        c_sc[...] = c_new
        h_sc[...] = h_new
        valid = (tc_idx * TC + s) < lens                    # (BB, 1) bool
        h_out_ref[s] = jnp.where(valid, h_new, jnp.zeros_like(h_new))
        return carry

    jax.lax.fori_loop(0, TC, step_fn, 0, unroll=min(TC, 8))


def lstm_layer(x_seq, lyr, ilens_p, Hp, TC, budget):
    # nb = 1: v5e/v6e have a single TensorCore, so splitting the batch axis only
    # serializes the latency-bound recurrence.
    # TODO(synk): nb = 2 with core-parallel semantics on v7x once verified.
    nb = 1
    T_pad, Bp, Dp = x_seq.shape
    G = 4 * Hp
    BB = Bp // nb
    ntc = T_pad // TC
    return pl.pallas_call(
        lstm_fused_kernel,
        out_shape=jax.ShapeDtypeStruct((T_pad, Bp, Hp), jnp.bfloat16),
        grid_spec=pltpu.PrefetchScalarGridSpec(
            num_scalar_prefetch=0,
            grid=(nb, ntc),
            in_specs=[
                pl.BlockSpec((TC, BB, Dp), lambda b, t: (t, b, 0)),   # x chunk
                _const_spec((Dp, G), lambda b, t: (0, 0)),            # W_ih^T
                _const_spec((Hp, G), lambda b, t: (0, 0)),            # W_hh^T
                _const_spec((1, G), lambda b, t: (0, 0)),             # bias
                pl.BlockSpec((BB, 1), lambda b, t: (b, 0)),           # ilens
            ],
            out_specs=pl.BlockSpec((TC, BB, Hp), lambda b, t: (t, b, 0)),
            scratch_shapes=[
                pltpu.VMEM((TC, BB, G), jnp.float32),   # gates_x for the chunk
                pltpu.VMEM((BB, Hp), jnp.bfloat16),     # h state (bf16)
                pltpu.VMEM((BB, Hp), jnp.float32),      # c state (f32)
            ],
        ),
        compiler_params=pltpu.CompilerParams(
            dimension_semantics=("parallel", "arbitrary"),
            vmem_limit_bytes=budget),
    )(x_seq, lyr["wihT"], lyr["whhT"], lyr["b"], ilens_p)


# -----------------------------------------------------------------------------
# Kernel 2: JoinAP-Linear head, tiled over (class columns, time chunks).
#   fused   : logits = lstm_out @ (M^T @ W_lin^T) + b
#   lowrank : logits = (lstm_out @ M^T) @ W_lin^T + b
# -----------------------------------------------------------------------------
def head_fused_kernel(x_ref, w_ref, b_ref, o_ref):
    tt, bb, hp = x_ref.shape
    x = x_ref[...].reshape(tt * bb, hp)
    acc = jnp.dot(x, w_ref[...], preferred_element_type=jnp.float32) + b_ref[...]
    o_ref[...] = acc.reshape(tt, bb, -1).astype(o_ref.dtype)


def head_lowrank_kernel(x_ref, m_ref, w_ref, b_ref, o_ref):
    tt, bb, hp = x_ref.shape
    x = x_ref[...].reshape(tt * bb, hp)
    proj = jnp.dot(x, m_ref[...], preferred_element_type=jnp.float32)
    acc = jnp.dot(proj.astype(jnp.bfloat16), w_ref[...],
                  preferred_element_type=jnp.float32) + b_ref[...]
    o_ref[...] = acc.reshape(tt, bb, -1).astype(o_ref.dtype)


def joinap_head(h_seq, head, Cp, budget):
    T_pad, Bp, Hp = h_seq.shape
    k_dim = Hp if head["mode"] == "fused" else head["m"].shape[1]
    tile_c = _pick_col_tile(Cp, k_dim, budget)
    ncol = Cp // tile_c
    tt = _pick_time_tile(T_pad, Bp, Hp, tile_c, budget)
    nt = T_pad // tt

    # streamed column tiles keep default double-buffering; a single resident
    # column tile (ncol == 1) is single-buffered.
    w_spec = _const_spec if ncol == 1 else pl.BlockSpec
    x_spec = pl.BlockSpec((tt, Bp, Hp), lambda c, t: (t, 0, 0))
    out_spec = pl.BlockSpec((tt, Bp, tile_c), lambda c, t: (t, 0, c))
    out_shape = jax.ShapeDtypeStruct((T_pad, Bp, Cp), jnp.float32)
    cparams = pltpu.CompilerParams(
        dimension_semantics=("parallel", "parallel"),
        vmem_limit_bytes=budget)

    if head["mode"] == "fused":
        return pl.pallas_call(
            head_fused_kernel,
            out_shape=out_shape,
            grid_spec=pltpu.PrefetchScalarGridSpec(
                num_scalar_prefetch=0,
                grid=(ncol, nt),
                in_specs=[
                    x_spec,
                    w_spec((Hp, tile_c), lambda c, t: (0, c)),
                    w_spec((1, tile_c), lambda c, t: (0, c)),
                ],
                out_specs=out_spec,
            ),
            compiler_params=cparams,
        )(h_seq, head["w"], head["b"])
    else:
        Pcp = head["m"].shape[1]
        return pl.pallas_call(
            head_lowrank_kernel,
            out_shape=out_shape,
            grid_spec=pltpu.PrefetchScalarGridSpec(
                num_scalar_prefetch=0,
                grid=(ncol, nt),
                in_specs=[
                    x_spec,
                    _const_spec((Hp, Pcp), lambda c, t: (0, 0)),
                    w_spec((Pcp, tile_c), lambda c, t: (0, c)),
                    w_spec((1, tile_c), lambda c, t: (0, c)),
                ],
                out_specs=out_spec,
            ),
            compiler_params=cparams,
        )(h_seq, head["m"], head["w"], head["b"])


# -----------------------------------------------------------------------------
# Parameter preparation: pad to lane-dense shapes (zeros), cast matmul weights
# to bf16, fold biases, precompute M = A(P) and (optionally) the fused head.
# -----------------------------------------------------------------------------
def prepare_params(raw, idim, hdim, num_classes, head_mode="auto"):
    Hp = _round_up(hdim, 128)
    Dp0 = _round_up(idim, 128)
    layers = []
    for li, lyr in enumerate(raw["lstm"]):
        d_in = idim if li == 0 else hdim
        Dp = Dp0 if li == 0 else Hp
        w_ih = lyr["w_ih"].reshape(4, hdim, d_in)
        w_ih = jnp.pad(w_ih, ((0, 0), (0, Hp - hdim), (0, Dp - d_in)))
        wihT = w_ih.reshape(4 * Hp, Dp).T.astype(jnp.bfloat16)       # (Dp, 4Hp)
        w_hh = lyr["w_hh"].reshape(4, hdim, hdim)
        w_hh = jnp.pad(w_hh, ((0, 0), (0, Hp - hdim), (0, Hp - hdim)))
        whhT = w_hh.reshape(4 * Hp, Hp).T.astype(jnp.bfloat16)       # (Hp, 4Hp)
        b = (lyr["b_ih"] + lyr["b_hh"]).reshape(4, hdim)
        b = jnp.pad(b, ((0, 0), (0, Hp - hdim))).reshape(1, 4 * Hp)
        layers.append({"wihT": wihT, "whhT": whhT, "b": b.astype(jnp.float32)})

    # M = A(P) is tile-invariant and tiny -> precompute once outside kernels.
    M = jnp.dot(raw["P"], raw["A_w"].T, precision=HIGHEST) + raw["A_b"]
    p_c = raw["P"].shape[0]
    C = num_classes
    Cp = _round_up(C, 128)
    lin_wT = raw["lin_w"].T                                           # (p_c, C)

    if head_mode == "auto":
        head_mode = "fused" if p_c * (hdim + C) > hdim * C else "lowrank"

    if head_mode == "fused":
        W1 = jnp.dot(M.T, lin_wT, precision=HIGHEST)                  # (H, C)
        W1 = jnp.pad(W1, ((0, Hp - hdim), (0, Cp - C))).astype(jnp.bfloat16)
        head = {"mode": "fused", "w": W1}
    else:
        Pcp = _round_up(p_c, 128)
        Mt = jnp.pad(M.T, ((0, Hp - hdim), (0, Pcp - p_c))).astype(jnp.bfloat16)
        W2 = jnp.pad(lin_wT, ((0, Pcp - p_c), (0, Cp - C))).astype(jnp.bfloat16)
        head = {"mode": "lowrank", "m": Mt, "w": W2}
    head["b"] = jnp.pad(raw["lin_b"], (0, Cp - C)).reshape(1, Cp).astype(jnp.float32)

    return {"lstm": layers, "head": head, "Hp": Hp, "Dp0": Dp0, "Cp": Cp,
            "num_classes": C, "vmem_budget": _vmem_budget_bytes()}


# -----------------------------------------------------------------------------
# Full forward (glue in plain JAX; hot paths in the kernels above).
# -----------------------------------------------------------------------------
def lstm_joinap_linear_forward(kparams, x, ilens, *, time_chunk=32):
    B, T, idim = x.shape
    Hp, Dp0, Cp = kparams["Hp"], kparams["Dp0"], kparams["Cp"]
    C = kparams["num_classes"]
    budget = kparams["vmem_budget"]

    Bp = _round_up(B, 8)          # sublane-aligned batch; padded rows masked to 0
    TC = _choose_time_chunk(T, Bp, max(Dp0, Hp), Hp, budget, time_chunk)
    T_pad = _round_up(T, TC)

    # single small transpose of the raw input to time-major; pad T, B and idim.
    x_tm = jnp.transpose(x, (1, 0, 2))                        # (T, B, idim)
    x_tm = jnp.pad(x_tm, ((0, T_pad - T), (0, Bp - B), (0, Dp0 - idim)))
    h_seq = x_tm.astype(jnp.bfloat16)                         # (T_pad, Bp, Dp0)

    ilens_p = jnp.pad(ilens.astype(jnp.int32), (0, Bp - B)).reshape(Bp, 1)

    for lyr in kparams["lstm"]:
        h_seq = lstm_layer(h_seq, lyr, ilens_p, Hp, TC, budget)

    logits = joinap_head(h_seq, kparams["head"], Cp, budget)  # (T_pad, Bp, Cp)
    logits = logits[:T, :B, :C]
    # TODO(synk): write (B, T, C) directly from the head out_spec (needs a
    # batch-major h_seq layout or an in-kernel leading-dim swap).
    return jnp.transpose(logits, (1, 0, 2)), ilens            # (B, T, C)


# -----------------------------------------------------------------------------
# Pure-JAX f32 reference (for a sanity check).
# -----------------------------------------------------------------------------
def ref_forward(raw, x, ilens):
    B, T, _ = x.shape
    h = jnp.transpose(x, (1, 0, 2))
    for lyr in raw["lstm"]:
        wihT, whhT = lyr["w_ih"].T, lyr["w_hh"].T
        b = lyr["b_ih"] + lyr["b_hh"]
        H = lyr["w_hh"].shape[1]

        def step(carry, x_t, wihT=wihT, whhT=whhT, b=b, H=H):
            hp, cp = carry
            g = (jnp.dot(x_t, wihT, precision=HIGHEST)
                 + jnp.dot(hp, whhT, precision=HIGHEST) + b)
            i = jax.nn.sigmoid(g[:, :H]); f = jax.nn.sigmoid(g[:, H:2 * H])
            gg = jnp.tanh(g[:, 2 * H:3 * H]); o = jax.nn.sigmoid(g[:, 3 * H:])
            c = f * cp + i * gg
            hn = o * jnp.tanh(c)
            return (hn, c), hn

        (_, _), h = jax.lax.scan(
            step, (jnp.zeros((B, H), jnp.float32),
                   jnp.zeros((B, H), jnp.float32)), h)
    lstm_out = jnp.transpose(h, (1, 0, 2))
    mask = (jnp.arange(T)[None, :] < ilens[:, None]).astype(lstm_out.dtype)
    lstm_out = lstm_out * mask[:, :, None]
    M = jnp.dot(raw["P"], raw["A_w"].T, precision=HIGHEST) + raw["A_b"]
    proj = jnp.einsum("bth,ch->btc", lstm_out, M, precision=HIGHEST)
    out = jnp.dot(proj, raw["lin_w"].T, precision=HIGHEST) + raw["lin_b"]
    return out, ilens


# -----------------------------------------------------------------------------
# Deterministic parameter construction (shapes follow the module's __init__).
# -----------------------------------------------------------------------------
def init_params_raw(key, idim, hdim, n_layers, num_classes, p_c, pv_dim=51):
    def uniform(k, shape, bound):
        return jax.random.uniform(k, shape, jnp.float32, -bound, bound)

    params = {"lstm": []}
    bound = 1.0 / np.sqrt(hdim)
    for layer in range(n_layers):
        d_in = idim if layer == 0 else hdim
        key, k1, k2, k3, k4 = jax.random.split(key, 5)
        params["lstm"].append({
            "w_ih": uniform(k1, (4 * hdim, d_in), bound),   # weight_ih_l{k}
            "w_hh": uniform(k2, (4 * hdim, hdim), bound),   # weight_hh_l{k}
            "b_ih": uniform(k3, (4 * hdim,), bound),
            "b_hh": uniform(k4, (4 * hdim,), bound),
        })

    key, kP, kAw, kAb, kLw, kLb = jax.random.split(key, 6)
    P = (jax.random.uniform(kP, (p_c, pv_dim)) > 0.5).astype(jnp.float32)
    bA = 1.0 / np.sqrt(pv_dim)
    A_w = uniform(kAw, (hdim, pv_dim), bA)                  # nn.Linear(51, hdim)
    A_b = uniform(kAb, (hdim,), bA)
    bL = 1.0 / np.sqrt(p_c)
    lin_w = uniform(kLw, (num_classes, p_c), bL)            # nn.Linear(p_c, C)
    lin_b = uniform(kLb, (num_classes,), bL)
    params.update({"P": P, "A_w": A_w, "A_b": A_b,
                   "lin_w": lin_w, "lin_b": lin_b})
    return params


if __name__ == "__main__":
    B, T = 2, 8
    idim, hdim, n_layers = 16, 32, 2
    num_classes, p_c = 24, 40

    key = jax.random.PRNGKey(0)
    kx, kp = jax.random.split(key)
    x = jax.random.normal(kx, (B, T, idim), jnp.float32)
    ilens = jnp.array([8, 5], dtype=jnp.int32)

    raw = init_params_raw(kp, idim, hdim, n_layers, num_classes, p_c)
    ref_out, ref_olens = ref_forward(raw, x, ilens)

    # exercise both head variants (auto -> fused at these sizes, plus lowrank)
    for mode in ("auto", "lowrank"):
        kparams = prepare_params(raw, idim, hdim, num_classes, head_mode=mode)
        out, olens = lstm_joinap_linear_forward(kparams, x, ilens)
        out = jax.block_until_ready(out)
        np.testing.assert_allclose(np.asarray(out), np.asarray(ref_out),
                                   rtol=5e-2, atol=5e-2)
        assert out.shape == (B, T, num_classes)
        assert np.array_equal(np.asarray(olens), np.asarray(ilens))

    print("KERNEL_OK")
</pallas_src>

<mosaic_0001>
module attributes {stable_mosaic.version = 11 : i64} {
  func.func @lstm_fused_kernel(%arg0: i32, %arg1: i32, %arg2: memref<8x8x128xbf16, #tpu.memory_space<vmem>>, %arg3: memref<128x512xbf16, #tpu.memory_space<vmem>>, %arg4: memref<128x512xbf16, #tpu.memory_space<vmem>>, %arg5: memref<1x512xf32, #tpu.memory_space<vmem>>, %arg6: memref<8x1xi32, #tpu.memory_space<vmem>>, %arg7: memref<8x8x128xbf16, #tpu.memory_space<vmem>>, %arg8: memref<8x8x512xf32, #tpu.memory_space<vmem>>, %arg9: memref<8x128xbf16, #tpu.memory_space<vmem>>, %arg10: memref<8x128xf32, #tpu.memory_space<vmem>>) attributes {dimension_semantics = [#tpu.dimension_semantics<parallel>, #tpu.dimension_semantics<arbitrary>], iteration_bounds = array<i64: 1, 1>, scalar_prefetch = 0 : i64, scratch_operands = 3 : i64, tpu.core_type = #tpu.core_type<tc>, window_params = [{transform_indices = @transform_0, window_bounds = array<i64: 8, 8, 128>}, {pipeline_mode = #tpu.pipeline_mode<synchronous>, transform_indices = @transform_1, window_bounds = array<i64: 128, 512>}, {pipeline_mode = #tpu.pipeline_mode<synchronous>, transform_indices = @transform_2, window_bounds = array<i64: 128, 512>}, {pipeline_mode = #tpu.pipeline_mode<synchronous>, transform_indices = @transform_3, window_bounds = array<i64: 1, 512>}, {transform_indices = @transform_4, window_bounds = array<i64: 8, 1>}, {transform_indices = @transform_5, window_bounds = array<i64: 8, 8, 128>}]} {
    %c0_i32 = arith.constant 0 : i32
    %0 = arith.cmpi eq, %arg1, %c0_i32 : i32
    %1 = arith.extui %0 : i1 to i32
    %c0_i32_0 = arith.constant 0 : i32
    %2 = arith.cmpi ne, %1, %c0_i32_0 : i32
    scf.if %2 {
      %cst_159 = arith.constant 0.000000e+00 : bf16
      %390 = vector.broadcast %cst_159 : bf16 to vector<8x128xbf16>
      %c0_160 = arith.constant 0 : index
      %c0_161 = arith.constant 0 : index
      %391 = vector.load %arg9[%c0_160, %c0_161] : memref<8x128xbf16, #tpu.memory_space<vmem>>, vector<8x128xbf16>
      tpu.vector_store %arg9[%c0_160, %c0_161], %390 {strides = array<i32>} : memref<8x128xbf16, #tpu.memory_space<vmem>>, vector<8x128xbf16>,
      %cst_162 = arith.constant 0.000000e+00 : f32
      %392 = vector.broadcast %cst_162 : f32 to vector<8x128xf32>
      %c0_163 = arith.constant 0 : index
      %c0_164 = arith.constant 0 : index
      %393 = vector.load %arg10[%c0_163, %c0_164] : memref<8x128xf32, #tpu.memory_space<vmem>>, vector<8x128xf32>
      tpu.vector_store %arg10[%c0_163, %c0_164], %392 {strides = array<i32>} : memref<8x128xf32, #tpu.memory_space<vmem>>, vector<8x128xf32>,
    } else {
    }
    %c0 = arith.constant 0 : index
    %c0_1 = arith.constant 0 : index
    %c0_2 = arith.constant 0 : index
    %3 = vector.load %arg2[%c0, %c0_1, %c0_2] : memref<8x8x128xbf16, #tpu.memory_space<vmem>>, vector<8x8x128xbf16>
    %4 = vector.shape_cast %3 : vector<8x8x128xbf16> to vector<64x128xbf16>
    %c0_3 = arith.constant 0 : index
    %c0_4 = arith.constant 0 : index
    %5 = vector.load %arg3[%c0_3, %c0_4] : memref<128x512xbf16, #tpu.memory_space<vmem>>, vector<128x512xbf16>
    %cst = arith.constant dense<0.000000e+00> : vector<64x512xf32>
    %6 = tpu.matmul %4, %5, %cst {dimension_numbers = #tpu.dot_dimension_numbers<[1], [0], [0], [1], [0, 0, 1, 1], [], []>} : vector<64x128xbf16>, vector<128x512xbf16>, vector<64x512xf32> -> vector<64x512xf32>
    %c0_5 = arith.constant 0 : index
    %c0_6 = arith.constant 0 : index
    %7 = vector.load %arg5[%c0_5, %c0_6] : memref<1x512xf32, #tpu.memory_space<vmem>>, vector<1x512xf32>
    %8 = vector.broadcast %7 : vector<1x512xf32> to vector<64x512xf32>
    %9 = arith.addf %6, %8 : vector<64x512xf32>
    %10 = vector.shape_cast %9 : vector<64x512xf32> to vector<8x8x512xf32>
    %c0_7 = arith.constant 0 : index
    %c0_8 = arith.constant 0 : index
    %c0_9 = arith.constant 0 : index
    %11 = vector.load %arg8[%c0_7, %c0_8, %c0_9] : memref<8x8x512xf32, #tpu.memory_space<vmem>>, vector<8x8x512xf32>
    tpu.vector_store %arg8[%c0_7, %c0_8, %c0_9], %10 {strides = array<i32>} : memref<8x8x512xf32, #tpu.memory_space<vmem>>, vector<8x8x512xf32>,
    %c0_10 = arith.constant 0 : index
    %c0_11 = arith.constant 0 : index
    %12 = vector.load %arg4[%c0_10, %c0_11] : memref<128x512xbf16, #tpu.memory_space<vmem>>, vector<128x512xbf16>
    %c0_12 = arith.constant 0 : index
    %c0_13 = arith.constant 0 : index
    %13 = vector.load %arg6[%c0_12, %c0_13] : memref<8x1xi32, #tpu.memory_space<vmem>>, vector<8x1xi32>
    %c0_i32_14 = arith.constant 0 : i32
    %14 = arith.index_cast %c0_i32_14 : i32 to index
    %c0_15 = arith.constant 0 : index
    %c0_16 = arith.constant 0 : index
    %15 = vector.load %arg8[%14, %c0_15, %c0_16] : memref<8x8x512xf32, #tpu.memory_space<vmem>>, vector<1x8x512xf32>
    %16 = vector.shape_cast %15 : vector<1x8x512xf32> to vector<8x512xf32>
    %c0_17 = arith.constant 0 : index
    %c0_18 = arith.constant 0 : index
    %17 = vector.load %arg9[%c0_17, %c0_18] : memref<8x128xbf16, #tpu.memory_space<vmem>>, vector<8x128xbf16>
    %cst_19 = arith.constant dense<0.000000e+00> : vector<8x512xf32>
    %18 = tpu.matmul %17, %12, %cst_19 {dimension_numbers = #tpu.dot_dimension_numbers<[1], [0], [0], [1], [0, 0, 1, 1], [], []>} : vector<8x128xbf16>, vector<128x512xbf16>, vector<8x512xf32> -> vector<8x512xf32>
    %19 = arith.addf %16, %18 : vector<8x512xf32>
    %20 = vector.extract_strided_slice %19 {offsets = [0, 0], sizes = [8, 128], strides = [1, 1]} : vector<8x512xf32> to vector<8x128xf32>
    %21 = arith.negf %20 : vector<8x128xf32>
    %22 = math.exp %21 : vector<8x128xf32>
    %cst_20 = arith.constant 1.000000e+00 : f32
    %23 = vector.broadcast %cst_20 : f32 to vector<8x128xf32>
    %24 = arith.addf %23, %22 : vector<8x128xf32>
    %25 = arith.divf %23, %24 : vector<8x128xf32>
    %26 = vector.extract_strided_slice %19 {offsets = [0, 128], sizes = [8, 128], strides = [1, 1]} : vector<8x512xf32> to vector<8x128xf32>
    %27 = arith.negf %26 : vector<8x128xf32>
    %28 = math.exp %27 : vector<8x128xf32>
    %cst_21 = arith.constant 1.000000e+00 : f32
    %29 = vector.broadcast %cst_21 : f32 to vector<8x128xf32>
    %30 = arith.addf %29, %28 : vector<8x128xf32>
    %31 = arith.divf %29, %30 : vector<8x128xf32>
    %32 = vector.extract_strided_slice %19 {offsets = [0, 256], sizes = [8, 128], strides = [1, 1]} : vector<8x512xf32> to vector<8x128xf32>
    %33 = math.tanh %32 : vector<8x128xf32>
    %34 = vector.extract_strided_slice %19 {offsets = [0, 384], sizes = [8, 128], strides = [1, 1]} : vector<8x512xf32> to vector<8x128xf32>
    %35 = arith.negf %34 : vector<8x128xf32>
    %36 = math.exp %35 : vector<8x128xf32>
    %cst_22 = arith.constant 1.000000e+00 : f32
    %37 = vector.broadcast %cst_22 : f32 to vector<8x128xf32>
    %38 = arith.addf %37, %36 : vector<8x128xf32>
    %39 = arith.divf %37, %38 : vector<8x128xf32>
    %c0_23 = arith.constant 0 : index
    %c0_24 = arith.constant 0 : index
    %40 = vector.load %arg10[%c0_23, %c0_24] : memref<8x128xf32, #tpu.memory_space<vmem>>, vector<8x128xf32>
    %41 = arith.mulf %31, %40 : vector<8x128xf32>
    %42 = arith.mulf %25, %33 : vector<8x128xf32>
    %43 = arith.addf %41, %42 : vector<8x128xf32>
    %44 = math.tanh %43 : vector<8x128xf32>
    %45 = arith.mulf %39, %44 : vector<8x128xf32>
    %46 = arith.truncf %45 : vector<8x128xf32> to vector<8x128xbf16>
    %c0_25 = arith.constant 0 : index
    %c0_26 = arith.constant 0 : index
    %47 = vector.load %arg10[%c0_25, %c0_26] : memref<8x128xf32, #tpu.memory_space<vmem>>, vector<8x128xf32>
    tpu.vector_store %arg10[%c0_25, %c0_26], %43 {strides = array<i32>} : memref<8x128xf32, #tpu.memory_space<vmem>>, vector<8x128xf32>,
    %c0_27 = arith.constant 0 : index
    %c0_28 = arith.constant 0 : index
    %48 = vector.load %arg9[%c0_27, %c0_28] : memref<8x128xbf16, #tpu.memory_space<vmem>>, vector<8x128xbf16>
    tpu.vector_store %arg9[%c0_27, %c0_28], %46 {strides = array<i32>} : memref<8x128xbf16, #tpu.memory_space<vmem>>, vector<8x128xbf16>,
    %c8_i32 = arith.constant 8 : i32
    %49 = arith.muli %arg1, %c8_i32 : i32
    %50 = arith.addi %49, %c0_i32_14 : i32
    %51 = vector.broadcast %50 : i32 to vector<8x1xi32>
    %52 = arith.cmpi slt, %51, %13 : vector<8x1xi32>
    %cst_29 = arith.constant 0.000000e+00 : bf16
    %53 = vector.broadcast %cst_29 : bf16 to vector<8x128xbf16>
    %54 = vector.shape_cast %52 : vector<8x1xi1> to vector<8x1xi1>
    %55 = vector.broadcast %54 : vector<8x1xi1> to vector<8x128xi1>
    %56 = arith.select %55, %46, %53 : vector<8x128xi1>, vector<8x128xbf16>
    %57 = arith.index_cast %c0_i32_14 : i32 to index
    %c0_30 = arith.constant 0 : index
    %c0_31 = arith.constant 0 : index
    %58 = vector.load %arg7[%57, %c0_30, %c0_31] : memref<8x8x128xbf16, #tpu.memory_space<vmem>>, vector<1x8x128xbf16>
    %59 = vector.shape_cast %58 : vector<1x8x128xbf16> to vector<8x128xbf16>
    %60 = vector.shape_cast %56 : vector<8x128xbf16> to vector<1x8x128xbf16>
    tpu.vector_store %arg7[%57, %c0_30, %c0_31], %60 {strides = array<i32>} : memref<8x8x128xbf16, #tpu.memory_space<vmem>>, vector<1x8x128xbf16>,
    %c1_i32 = arith.constant 1 : i32
    %61 = arith.index_cast %c1_i32 : i32 to index
    %c0_32 = arith.constant 0 : index
    %c0_33 = arith.constant 0 : index
    %62 = vector.load %arg8[%61, %c0_32, %c0_33] : memref<8x8x512xf32, #tpu.memory_space<vmem>>, vector<1x8x512xf32>
    %63 = vector.shape_cast %62 : vector<1x8x512xf32> to vector<8x512xf32>
    %c0_34 = arith.constant 0 : index
    %c0_35 = arith.constant 0 : index
    %64 = vector.load %arg9[%c0_34, %c0_35] : memref<8x128xbf16, #tpu.memory_space<vmem>>, vector<8x128xbf16>
    %cst_36 = arith.constant dense<0.000000e+00> : vector<8x512xf32>
    %65 = tpu.matmul %64, %12, %cst_36 {dimension_numbers = #tpu.dot_dimension_numbers<[1], [0], [0], [1], [0, 0, 1, 1], [], []>} : vector<8x128xbf16>, vector<128x512xbf16>, vector<8x512xf32> -> vector<8x512xf32>
    %66 = arith.addf %63, %65 : vector<8x512xf32>
    %67 = vector.extract_strided_slice %66 {offsets = [0, 0], sizes = [8, 128], strides = [1, 1]} : vector<8x512xf32> to vector<8x128xf32>
    %68 = arith.negf %67 : vector<8x128xf32>
    %69 = math.exp %68 : vector<8x128xf32>
    %cst_37 = arith.constant 1.000000e+00 : f32
    %70 = vector.broadcast %cst_37 : f32 to vector<8x128xf32>
    %71 = arith.addf %70, %69 : vector<8x128xf32>
    %72 = arith.divf %70, %71 : vector<8x128xf32>
    %73 = vector.extract_strided_slice %66 {offsets = [0, 128], sizes = [8, 128], strides = [1, 1]} : vector<8x512xf32> to vector<8x128xf32>
    %74 = arith.negf %73 : vector<8x128xf32>
    %75 = math.exp %74 : vector<8x128xf32>
    %cst_38 = arith.constant 1.000000e+00 : f32
    %76 = vector.broadcast %cst_38 : f32 to vector<8x128xf32>
    %77 = arith.addf %76, %75 : vector<8x128xf32>
    %78 = arith.divf %76, %77 : vector<8x128xf32>
    %79 = vector.extract_strided_slice %66 {offsets = [0, 256], sizes = [8, 128], strides = [1, 1]} : vector<8x512xf32> to vector<8x128xf32>
    %80 = math.tanh %79 : vector<8x128xf32>
    %81 = vector.extract_strided_slice %66 {offsets = [0, 384], sizes = [8, 128], strides = [1, 1]} : vector<8x512xf32> to vector<8x128xf32>
    %82 = arith.negf %81 : vector<8x128xf32>
    %83 = math.exp %82 : vector<8x128xf32>
    %cst_39 = arith.constant 1.000000e+00 : f32
    %84 = vector.broadcast %cst_39 : f32 to vector<8x128xf32>
    %85 = arith.addf %84, %83 : vector<8x128xf32>
    %86 = arith.divf %84, %85 : vector<8x128xf32>
    %c0_40 = arith.constant 0 : index
    %c0_41 = arith.constant 0 : index
    %87 = vector.load %arg10[%c0_40, %c0_41] : memref<8x128xf32, #tpu.memory_space<vmem>>, vector<8x128xf32>
    %88 = arith.mulf %78, %87 : vector<8x128xf32>
    %89 = arith.mulf %72, %80 : vector<8x128xf32>
    %90 = arith.addf %88, %89 : vector<8x128xf32>
    %91 = math.tanh %90 : vector<8x128xf32>
    %92 = arith.mulf %86, %91 : vector<8x128xf32>
    %93 = arith.truncf %92 : vector<8x128xf32> to vector<8x128xbf16>
    %c0_42 = arith.constant 0 : index
    %c0_43 = arith.constant 0 : index
    %94 = vector.load %arg10[%c0_42, %c0_43] : memref<8x128xf32, #tpu.memory_space<vmem>>, vector<8x128xf32>
    tpu.vector_store %arg10[%c0_42, %c0_43], %90 {strides = array<i32>} : memref<8x128xf32, #tpu.memory_space<vmem>>, vector<8x128xf32>,
    %c0_44 = arith.constant 0 : index
    %c0_45 = arith.constant 0 : index
    %95 = vector.load %arg9[%c0_44, %c0_45] : memref<8x128xbf16, #tpu.memory_space<vmem>>, vector<8x128xbf16>
    tpu.vector_store %arg9[%c0_44, %c0_45], %93 {strides = array<i32>} : memref<8x128xbf16, #tpu.memory_space<vmem>>, vector<8x128xbf16>,
    %c8_i32_46 = arith.constant 8 : i32
    %96 = arith.muli %arg1, %c8_i32_46 : i32
    %97 = arith.addi %96, %c1_i32 : i32
    %98 = vector.broadcast %97 : i32 to vector<8x1xi32>
    %99 = arith.cmpi slt, %98, %13 : vector<8x1xi32>
    %cst_47 = arith.constant 0.000000e+00 : bf16
    %100 = vector.broadcast %cst_47 : bf16 to vector<8x128xbf16>
    %101 = vector.shape_cast %99 : vector<8x1xi1> to vector<8x1xi1>
    %102 = vector.broadcast %101 : vector<8x1xi1> to vector<8x128xi1>
    %103 = arith.select %102, %93, %100 : vector<8x128xi1>, vector<8x128xbf16>
    %104 = arith.index_cast %c1_i32 : i32 to index
    %c0_48 = arith.constant 0 : index
    %c0_49 = arith.constant 0 : index
    %105 = vector.load %arg7[%104, %c0_48, %c0_49] : memref<8x8x128xbf16, #tpu.memory_space<vmem>>, vector<1x8x128xbf16>
    %106 = vector.shape_cast %105 : vector<1x8x128xbf16> to vector<8x128xbf16>
    %107 = vector.shape_cast %103 : vector<8x128xbf16> to vector<1x8x128xbf16>
    tpu.vector_store %arg7[%104, %c0_48, %c0_49], %107 {strides = array<i32>} : memref<8x8x128xbf16, #tpu.memory_space<vmem>>, vector<1x8x128xbf16>,
    %c2_i32 = arith.constant 2 : i32
    %108 = arith.index_cast %c2_i32 : i32 to index
    %c0_50 = arith.constant 0 : index
    %c0_51 = arith.constant 0 : index
    %109 = vector.load %arg8[%108, %c0_50, %c0_51] : memref<8x8x512xf32, #tpu.memory_space<vmem>>, vector<1x8x512xf32>
    %110 = vector.shape_cast %109 : vector<1x8x512xf32> to vector<8x512xf32>
    %c0_52 = arith.constant 0 : index
    %c0_53 = arith.constant 0 : index
    %111 = vector.load %arg9[%c0_52, %c0_53] : memref<8x128xbf16, #tpu.memory_space<vmem>>, vector<8x128xbf16>
    %cst_54 = arith.constant dense<0.000000e+00> : vector<8x512xf32>
    %112 = tpu.matmul %111, %12, %cst_54 {dimension_numbers = #tpu.dot_dimension_numbers<[1], [0], [0], [1], [0, 0, 1, 1], [], []>} : vector<8x128xbf16>, vector<128x512xbf16>, vector<8x512xf32> -> vector<8x512xf32>
    %113 = arith.addf %110, %112 : vector<8x512xf32>
    %114 = vector.extract_strided_slice %113 {offsets = [0, 0], sizes = [8, 128], strides = [1, 1]} : vector<8x512xf32> to vector<8x128xf32>
    %115 = arith.negf %114 : vector<8x128xf32>
    %116 = math.exp %115 : vector<8x128xf32>
    %cst_55 = arith.constant 1.000000e+00 : f32
    %117 = vector.broadcast %cst_55 : f32 to vector<8x128xf32>
    %118 = arith.addf %117, %116 : vector<8x128xf32>
    %119 = arith.divf %117, %118 : vector<8x128xf32>
    %120 = vector.extract_strided_slice %113 {offsets = [0, 128], sizes = [8, 128], strides = [1, 1]} : vector<8x512xf32> to vector<8x128xf32>
    %121 = arith.negf %120 : vector<8x128xf32>
    %122 = math.exp %121 : vector<8x128xf32>
    %cst_56 = arith.constant 1.000000e+00 : f32
    %123 = vector.broadcast %cst_56 : f32 to vector<8x128xf32>
    %124 = arith.addf %123, %122 : vector<8x128xf32>
    %125 = arith.divf %123, %124 : vector<8x128xf32>
    %126 = vector.extract_strided_slice %113 {offsets = [0, 256], sizes = [8, 128], strides = [1, 1]} : vector<8x512xf32> to vector<8x128xf32>
    %127 = math.tanh %126 : vector<8x128xf32>
    %128 = vector.extract_strided_slice %113 {offsets = [0, 384], sizes = [8, 128], strides = [1, 1]} : vector<8x512xf32> to vector<8x128xf32>
    %129 = arith.negf %128 : vector<8x128xf32>
    %130 = math.exp %129 : vector<8x128xf32>
    %cst_57 = arith.constant 1.000000e+00 : f32
    %131 = vector.broadcast %cst_57 : f32 to vector<8x128xf32>
    %132 = arith.addf %131, %130 : vector<8x128xf32>
    %133 = arith.divf %131, %132 : vector<8x128xf32>
    %c0_58 = arith.constant 0 : index
    %c0_59 = arith.constant 0 : index
    %134 = vector.load %arg10[%c0_58, %c0_59] : memref<8x128xf32, #tpu.memory_space<vmem>>, vector<8x128xf32>
    %135 = arith.mulf %125, %134 : vector<8x128xf32>
    %136 = arith.mulf %119, %127 : vector<8x128xf32>
    %137 = arith.addf %135, %136 : vector<8x128xf32>
    %138 = math.tanh %137 : vector<8x128xf32>
    %139 = arith.mulf %133, %138 : vector<8x128xf32>
    %140 = arith.truncf %139 : vector<8x128xf32> to vector<8x128xbf16>
    %c0_60 = arith.constant 0 : index
    %c0_61 = arith.constant 0 : index
    %141 = vector.load %arg10[%c0_60, %c0_61] : memref<8x128xf32, #tpu.memory_space<vmem>>, vector<8x128xf32>
    tpu.vector_store %arg10[%c0_60, %c0_61], %137 {strides = array<i32>} : memref<8x128xf32, #tpu.memory_space<vmem>>, vector<8x128xf32>,
    %c0_62 = arith.constant 0 : index
    %c0_63 = arith.constant 0 : index
    %142 = vector.load %arg9[%c0_62, %c0_63] : memref<8x128xbf16, #tpu.memory_space<vmem>>, vector<8x128xbf16>
    tpu.vector_store %arg9[%c0_62, %c0_63], %140 {strides = array<i32>} : memref<8x128xbf16, #tpu.memory_space<vmem>>, vector<8x128xbf16>,
    %c8_i32_64 = arith.constant 8 : i32
    %143 = arith.muli %arg1, %c8_i32_64 : i32
    %144 = arith.addi %143, %c2_i32 : i32
    %145 = vector.broadcast %144 : i32 to vector<8x1xi32>
    %146 = arith.cmpi slt, %145, %13 : vector<8x1xi32>
    %cst_65 = arith.constant 0.000000e+00 : bf16
    %147 = vector.broadcast %cst_65 : bf16 to vector<8x128xbf16>
    %148 = vector.shape_cast %146 : vector<8x1xi1> to vector<8x1xi1>
    %149 = vector.broadcast %148 : vector<8x1xi1> to vector<8x128xi1>
    %150 = arith.select %149, %140, %147 : vector<8x128xi1>, vector<8x128xbf16>
    %151 = arith.index_cast %c2_i32 : i32 to index
    %c0_66 = arith.constant 0 : index
    %c0_67 = arith.constant 0 : index
    %152 = vector.load %arg7[%151, %c0_66, %c0_67] : memref<8x8x128xbf16, #tpu.memory_space<vmem>>, vector<1x8x128xbf16>
    %153 = vector.shape_cast %152 : vector<1x8x128xbf16> to vector<8x128xbf16>
    %154 = vector.shape_cast %150 : vector<8x128xbf16> to vector<1x8x128xbf16>
    tpu.vector_store %arg7[%151, %c0_66, %c0_67], %154 {strides = array<i32>} : memref<8x8x128xbf16, #tpu.memory_space<vmem>>, vector<1x8x128xbf16>,
    %c3_i32 = arith.constant 3 : i32
    %155 = arith.index_cast %c3_i32 : i32 to index
    %c0_68 = arith.constant 0 : index
    %c0_69 = arith.constant 0 : index
    %156 = vector.load %arg8[%155, %c0_68, %c0_69] : memref<8x8x512xf32, #tpu.memory_space<vmem>>, vector<1x8x512xf32>
    %157 = vector.shape_cast %156 : vector<1x8x512xf32> to vector<8x512xf32>
    %c0_70 = arith.constant 0 : index
    %c0_71 = arith.constant 0 : index
    %158 = vector.load %arg9[%c0_70, %c0_71] : memref<8x128xbf16, #tpu.memory_space<vmem>>, vector<8x128xbf16>
    %cst_72 = arith.constant dense<0.000000e+00> : vector<8x512xf32>
    %159 = tpu.matmul %158, %12, %cst_72 {dimension_numbers = #tpu.dot_dimension_numbers<[1], [0], [0], [1], [0, 0, 1, 1], [], []>} : vector<8x128xbf16>, vector<128x512xbf16>, vector<8x512xf32> -> vector<8x512xf32>
    %160 = arith.addf %157, %159 : vector<8x512xf32>
    %161 = vector.extract_strided_slice %160 {offsets = [0, 0], sizes = [8, 128], strides = [1, 1]} : vector<8x512xf32> to vector<8x128xf32>
    %162 = arith.negf %161 : vector<8x128xf32>
    %163 = math.exp %162 : vector<8x128xf32>
    %cst_73 = arith.constant 1.000000e+00 : f32
    %164 = vector.broadcast %cst_73 : f32 to vector<8x128xf32>
    %165 = arith.addf %164, %163 : vector<8x128xf32>
    %166 = arith.divf %164, %165 : vector<8x128xf32>
    %167 = vector.extract_strided_slice %160 {offsets = [0, 128], sizes = [8, 128], strides = [1, 1]} : vector<8x512xf32> to vector<8x128xf32>
    %168 = arith.negf %167 : vector<8x128xf32>
    %169 = math.exp %168 : vector<8x128xf32>
    %cst_74 = arith.constant 1.000000e+00 : f32
    %170 = vector.broadcast %cst_74 : f32 to vector<8x128xf32>
    %171 = arith.addf %170, %169 : vector<8x128xf32>
    %172 = arith.divf %170, %171 : vector<8x128xf32>
    %173 = vector.extract_strided_slice %160 {offsets = [0, 256], sizes = [8, 128], strides = [1, 1]} : vector<8x512xf32> to vector<8x128xf32>
    %174 = math.tanh %173 : vector<8x128xf32>
    %175 = vector.extract_strided_slice %160 {offsets = [0, 384], sizes = [8, 128], strides = [1, 1]} : vector<8x512xf32> to vector<8x128xf32>
    %176 = arith.negf %175 : vector<8x128xf32>
    %177 = math.exp %176 : vector<8x128xf32>
    %cst_75 = arith.constant 1.000000e+00 : f32
    %178 = vector.broadcast %cst_75 : f32 to vector<8x128xf32>
    %179 = arith.addf %178, %177 : vector<8x128xf32>
    %180 = arith.divf %178, %179 : vector<8x128xf32>
    %c0_76 = arith.constant 0 : index
    %c0_77 = arith.constant 0 : index
    %181 = vector.load %arg10[%c0_76, %c0_77] : memref<8x128xf32, #tpu.memory_space<vmem>>, vector<8x128xf32>
    %182 = arith.mulf %172, %181 : vector<8x128xf32>
    %183 = arith.mulf %166, %174 : vector<8x128xf32>
    %184 = arith.addf %182, %183 : vector<8x128xf32>
    %185 = math.tanh %184 : vector<8x128xf32>
    %186 = arith.mulf %180, %185 : vector<8x128xf32>
    %187 = arith.truncf %186 : vector<8x128xf32> to vector<8x128xbf16>
    %c0_78 = arith.constant 0 : index
    %c0_79 = arith.constant 0 : index
    %188 = vector.load %arg10[%c0_78, %c0_79] : memref<8x128xf32, #tpu.memory_space<vmem>>, vector<8x128xf32>
    tpu.vector_store %arg10[%c0_78, %c0_79], %184 {strides = array<i32>} : memref<8x128xf32, #tpu.memory_space<vmem>>, vector<8x128xf32>,
    %c0_80 = arith.constant 0 : index
    %c0_81 = arith.constant 0 : index
    %189 = vector.load %arg9[%c0_80, %c0_81] : memref<8x128xbf16, #tpu.memory_space<vmem>>, vector<8x128xbf16>
    tpu.vector_store %arg9[%c0_80, %c0_81], %187 {strides = array<i32>} : memref<8x128xbf16, #tpu.memory_space<vmem>>, vector<8x128xbf16>,
    %c8_i32_82 = arith.constant 8 : i32
    %190 = arith.muli %arg1, %c8_i32_82 : i32
    %191 = arith.addi %190, %c3_i32 : i32
    %192 = vector.broadcast %191 : i32 to vector<8x1xi32>
    %193 = arith.cmpi slt, %192, %13 : vector<8x1xi32>
    %cst_83 = arith.constant 0.000000e+00 : bf16
    %194 = vector.broadcast %cst_83 : bf16 to vector<8x128xbf16>
    %195 = vector.shape_cast %193 : vector<8x1xi1> to vector<8x1xi1>
    %196 = vector.broadcast %195 : vector<8x1xi1> to vector<8x128xi1>
    %197 = arith.select %196, %187, %194 : vector<8x128xi1>, vector<8x128xbf16>
    %198 = arith.index_cast %c3_i32 : i32 to index
    %c0_84 = arith.constant 0 : index
    %c0_85 = arith.constant 0 : index
    %199 = vector.load %arg7[%198, %c0_84, %c0_85] : memref<8x8x128xbf16, #tpu.memory_space<vmem>>, vector<1x8x128xbf16>
    %200 = vector.shape_cast %199 : vector<1x8x128xbf16> to vector<8x128xbf16>
    %201 = vector.shape_cast %197 : vector<8x128xbf16> to vector<1x8x128xbf16>
    tpu.vector_store %arg7[%198, %c0_84, %c0_85], %201 {strides = array<i32>} : memref<8x8x128xbf16, #tpu.memory_space<vmem>>, vector<1x8x128xbf16>,
    %c4_i32 = arith.constant 4 : i32
    %202 = arith.index_cast %c4_i32 : i32 to index
    %c0_86 = arith.constant 0 : index
    %c0_87 = arith.constant 0 : index
    %203 = vector.load %arg8[%202, %c0_86, %c0_87] : memref<8x8x512xf32, #tpu.memory_space<vmem>>, vector<1x8x512xf32>
    %204 = vector.shape_cast %203 : vector<1x8x512xf32> to vector<8x512xf32>
    %c0_88 = arith.constant 0 : index
    %c0_89 = arith.constant 0 : index
    %205 = vector.load %arg9[%c0_88, %c0_89] : memref<8x128xbf16, #tpu.memory_space<vmem>>, vector<8x128xbf16>
    %cst_90 = arith.constant dense<0.000000e+00> : vector<8x512xf32>
    %206 = tpu.matmul %205, %12, %cst_90 {dimension_numbers = #tpu.dot_dimension_numbers<[1], [0], [0], [1], [0, 0, 1, 1], [], []>} : vector<8x128xbf16>, vector<128x512xbf16>, vector<8x512xf32> -> vector<8x512xf32>
    %207 = arith.addf %204, %206 : vector<8x512xf32>
    %208 = vector.extract_strided_slice %207 {offsets = [0, 0], sizes = [8, 128], strides = [1, 1]} : vector<8x512xf32> to vector<8x128xf32>
    %209 = arith.negf %208 : vector<8x128xf32>
    %210 = math.exp %209 : vector<8x128xf32>
    %cst_91 = arith.constant 1.000000e+00 : f32
    %211 = vector.broadcast %cst_91 : f32 to vector<8x128xf32>
    %212 = arith.addf %211, %210 : vector<8x128xf32>
    %213 = arith.divf %211, %212 : vector<8x128xf32>
    %214 = vector.extract_strided_slice %207 {offsets = [0, 128], sizes = [8, 128], strides = [1, 1]} : vector<8x512xf32> to vector<8x128xf32>
    %215 = arith.negf %214 : vector<8x128xf32>
    %216 = math.exp %215 : vector<8x128xf32>
    %cst_92 = arith.constant 1.000000e+00 : f32
    %217 = vector.broadcast %cst_92 : f32 to vector<8x128xf32>
    %218 = arith.addf %217, %216 : vector<8x128xf32>
    %219 = arith.divf %217, %218 : vector<8x128xf32>
    %220 = vector.extract_strided_slice %207 {offsets = [0, 256], sizes = [8, 128], strides = [1, 1]} : vector<8x512xf32> to vector<8x128xf32>
    %221 = math.tanh %220 : vector<8x128xf32>
    %222 = vector.extract_strided_slice %207 {offsets = [0, 384], sizes = [8, 128], strides = [1, 1]} : vector<8x512xf32> to vector<8x128xf32>
    %223 = arith.negf %222 : vector<8x128xf32>
    %224 = math.exp %223 : vector<8x128xf32>
    %cst_93 = arith.constant 1.000000e+00 : f32
    %225 = vector.broadcast %cst_93 : f32 to vector<8x128xf32>
    %226 = arith.addf %225, %224 : vector<8x128xf32>
    %227 = arith.divf %225, %226 : vector<8x128xf32>
    %c0_94 = arith.constant 0 : index
    %c0_95 = arith.constant 0 : index
    %228 = vector.load %arg10[%c0_94, %c0_95] : memref<8x128xf32, #tpu.memory_space<vmem>>, vector<8x128xf32>
    %229 = arith.mulf %219, %228 : vector<8x128xf32>
    %230 = arith.mulf %213, %221 : vector<8x128xf32>
    %231 = arith.addf %229, %230 : vector<8x128xf32>
    %232 = math.tanh %231 : vector<8x128xf32>
    %233 = arith.mulf %227, %232 : vector<8x128xf32>
    %234 = arith.truncf %233 : vector<8x128xf32> to vector<8x128xbf16>
    %c0_96 = arith.constant 0 : index
    %c0_97 = arith.constant 0 : index
    %235 = vector.load %arg10[%c0_96, %c0_97] : memref<8x128xf32, #tpu.memory_space<vmem>>, vector<8x128xf32>
    tpu.vector_store %arg10[%c0_96, %c0_97], %231 {strides = array<i32>} : memref<8x128xf32, #tpu.memory_space<vmem>>, vector<8x128xf32>,
    %c0_98 = arith.constant 0 : index
    %c0_99 = arith.constant 0 : index
    %236 = vector.load %arg9[%c0_98, %c0_99] : memref<8x128xbf16, #tpu.memory_space<vmem>>, vector<8x128xbf16>
    tpu.vector_store %arg9[%c0_98, %c0_99], %234 {strides = array<i32>} : memref<8x128xbf16, #tpu.memory_space<vmem>>, vector<8x128xbf16>,
    %c8_i32_100 = arith.constant 8 : i32
    %237 = arith.muli %arg1, %c8_i32_100 : i32
    %238 = arith.addi %237, %c4_i32 : i32
    %239 = vector.broadcast %238 : i32 to vector<8x1xi32>
    %240 = arith.cmpi slt, %239, %13 : vector<8x1xi32>
    %cst_101 = arith.constant 0.000000e+00 : bf16
    %241 = vector.broadcast %cst_101 : bf16 to vector<8x128xbf16>
    %242 = vector.shape_cast %240 : vector<8x1xi1> to vector<8x1xi1>
    %243 = vector.broadcast %242 : vector<8x1xi1> to vector<8x128xi1>
    %244 = arith.select %243, %234, %241 : vector<8x128xi1>, vector<8x128xbf16>
    %245 = arith.index_cast %c4_i32 : i32 to index
    %c0_102 = arith.constant 0 : index
    %c0_103 = arith.constant 0 : index
    %246 = vector.load %arg7[%245, %c0_102, %c0_103] : memref<8x8x128xbf16, #tpu.memory_space<vmem>>, vector<1x8x128xbf16>
    %247 = vector.shape_cast %246 : vector<1x8x128xbf16> to vector<8x128xbf16>
    %248 = vector.shape_cast %244 : vector<8x128xbf16> to vector<1x8x128xbf16>
    tpu.vector_store %arg7[%245, %c0_102, %c0_103], %248 {strides = array<i32>} : memref<8x8x128xbf16, #tpu.memory_space<vmem>>, vector<1x8x128xbf16>,
    %c5_i32 = arith.constant 5 : i32
    %249 = arith.index_cast %c5_i32 : i32 to index
    %c0_104 = arith.constant 0 : index
    %c0_105 = arith.constant 0 : index
    %250 = vector.load %arg8[%249, %c0_104, %c0_105] : memref<8x8x512xf32, #tpu.memory_space<vmem>>, vector<1x8x512xf32>
    %251 = vector.shape_cast %250 : vector<1x8x512xf32> to vector<8x512xf32>
    %c0_106 = arith.constant 0 : index
    %c0_107 = arith.constant 0 : index
    %252 = vector.load %arg9[%c0_106, %c0_107] : memref<8x128xbf16, #tpu.memory_space<vmem>>, vector<8x128xbf16>
    %cst_108 = arith.constant dense<0.000000e+00> : vector<8x512xf32>
    %253 = tpu.matmul %252, %12, %cst_108 {dimension_numbers = #tpu.dot_dimension_numbers<[1], [0], [0], [1], [0, 0, 1, 1], [], []>} : vector<8x128xbf16>, vector<128x512xbf16>, vector<8x512xf32> -> vector<8x512xf32>
    %254 = arith.addf %251, %253 : vector<8x512xf32>
    %255 = vector.extract_strided_slice %254 {offsets = [0, 0], sizes = [8, 128], strides = [1, 1]} : vector<8x512xf32> to vector<8x128xf32>
    %256 = arith.negf %255 : vector<8x128xf32>
    %257 = math.exp %256 : vector<8x128xf32>
    %cst_109 = arith.constant 1.000000e+00 : f32
    %258 = vector.broadcast %cst_109 : f32 to vector<8x128xf32>
    %259 = arith.addf %258, %257 : vector<8x128xf32>
    %260 = arith.divf %258, %259 : vector<8x128xf32>
    %261 = vector.extract_strided_slice %254 {offsets = [0, 128], sizes = [8, 128], strides = [1, 1]} : vector<8x512xf32> to vector<8x128xf32>
    %262 = arith.negf %261 : vector<8x128xf32>
    %263 = math.exp %262 : vector<8x128xf32>
    %cst_110 = arith.constant 1.000000e+00 : f32
    %264 = vector.broadcast %cst_110 : f32 to vector<8x128xf32>
    %265 = arith.addf %264, %263 : vector<8x128xf32>
    %266 = arith.divf %264, %265 : vector<8x128xf32>
    %267 = vector.extract_strided_slice %254 {offsets = [0, 256], sizes = [8, 128], strides = [1, 1]} : vector<8x512xf32> to vector<8x128xf32>
    %268 = math.tanh %267 : vector<8x128xf32>
    %269 = vector.extract_strided_slice %254 {offsets = [0, 384], sizes = [8, 128], strides = [1, 1]} : vector<8x512xf32> to vector<8x128xf32>
    %270 = arith.negf %269 : vector<8x128xf32>
    %271 = math.exp %270 : vector<8x128xf32>
    %cst_111 = arith.constant 1.000000e+00 : f32
    %272 = vector.broadcast %cst_111 : f32 to vector<8x128xf32>
    %273 = arith.addf %272, %271 : vector<8x128xf32>
    %274 = arith.divf %272, %273 : vector<8x128xf32>
    %c0_112 = arith.constant 0 : index
    %c0_113 = arith.constant 0 : index
    %275 = vector.load %arg10[%c0_112, %c0_113] : memref<8x128xf32, #tpu.memory_space<vmem>>, vector<8x128xf32>
    %276 = arith.mulf %266, %275 : vector<8x128xf32>
    %277 = arith.mulf %260, %268 : vector<8x128xf32>
    %278 = arith.addf %276, %277 : vector<8x128xf32>
    %279 = math.tanh %278 : vector<8x128xf32>
    %280 = arith.mulf %274, %279 : vector<8x128xf32>
    %281 = arith.truncf %280 : vector<8x128xf32> to vector<8x128xbf16>
    %c0_114 = arith.constant 0 : index
    %c0_115 = arith.constant 0 : index
    %282 = vector.load %arg10[%c0_114, %c0_115] : memref<8x128xf32, #tpu.memory_space<vmem>>, vector<8x128xf32>
    tpu.vector_store %arg10[%c0_114, %c0_115], %278 {strides = array<i32>} : memref<8x128xf32, #tpu.memory_space<vmem>>, vector<8x128xf32>,
    %c0_116 = arith.constant 0 : index
    %c0_117 = arith.constant 0 : index
    %283 = vector.load %arg9[%c0_116, %c0_117] : memref<8x128xbf16, #tpu.memory_space<vmem>>, vector<8x128xbf16>
    tpu.vector_store %arg9[%c0_116, %c0_117], %281 {strides = array<i32>} : memref<8x128xbf16, #tpu.memory_space<vmem>>, vector<8x128xbf16>,
    %c8_i32_118 = arith.constant 8 : i32
    %284 = arith.muli %arg1, %c8_i32_118 : i32
    %285 = arith.addi %284, %c5_i32 : i32
    %286 = vector.broadcast %285 : i32 to vector<8x1xi32>
    %287 = arith.cmpi slt, %286, %13 : vector<8x1xi32>
    %cst_119 = arith.constant 0.000000e+00 : bf16
    %288 = vector.broadcast %cst_119 : bf16 to vector<8x128xbf16>
    %289 = vector.shape_cast %287 : vector<8x1xi1> to vector<8x1xi1>
    %290 = vector.broadcast %289 : vector<8x1xi1> to vector<8x128xi1>
    %291 = arith.select %290, %281, %288 : vector<8x128xi1>, vector<8x128xbf16>
    %292 = arith.index_cast %c5_i32 : i32 to index
    %c0_120 = arith.constant 0 : index
    %c0_121 = arith.constant 0 : index
    %293 = vector.load %arg7[%292, %c0_120, %c0_121] : memref<8x8x128xbf16, #tpu.memory_space<vmem>>, vector<1x8x128xbf16>
    %294 = vector.shape_cast %293 : vector<1x8x128xbf16> to vector<8x128xbf16>
    %295 = vector.shape_cast %291 : vector<8x128xbf16> to vector<1x8x128xbf16>
    tpu.vector_store %arg7[%292, %c0_120, %c0_121], %295 {strides = array<i32>} : memref<8x8x128xbf16, #tpu.memory_space<vmem>>, vector<1x8x128xbf16>,
    %c6_i32 = arith.constant 6 : i32
    %296 = arith.index_cast %c6_i32 : i32 to index
    %c0_122 = arith.constant 0 : index
    %c0_123 = arith.constant 0 : index
    %297 = vector.load %arg8[%296, %c0_122, %c0_123] : memref<8x8x512xf32, #tpu.memory_space<vmem>>, vector<1x8x512xf32>
    %298 = vector.shape_cast %297 : vector<1x8x512xf32> to vector<8x512xf32>
    %c0_124 = arith.constant 0 : index
    %c0_125 = arith.constant 0 : index
    %299 = vector.load %arg9[%c0_124, %c0_125] : memref<8x128xbf16, #tpu.memory_space<vmem>>, vector<8x128xbf16>
    %cst_126 = arith.constant dense<0.000000e+00> : vector<8x512xf32>
    %300 = tpu.matmul %299, %12, %cst_126 {dimension_numbers = #tpu.dot_dimension_numbers<[1], [0], [0], [1], [0, 0, 1, 1], [], []>} : vector<8x128xbf16>, vector<128x512xbf16>, vector<8x512xf32> -> vector<8x512xf32>
    %301 = arith.addf %298, %300 : vector<8x512xf32>
    %302 = vector.extract_strided_slice %301 {offsets = [0, 0], sizes = [8, 128], strides = [1, 1]} : vector<8x512xf32> to vector<8x128xf32>
    %303 = arith.negf %302 : vector<8x128xf32>
    %304 = math.exp %303 : vector<8x128xf32>
    %cst_127 = arith.constant 1.000000e+00 : f32
    %305 = vector.broadcast %cst_127 : f32 to vector<8x128xf32>
    %306 = arith.addf %305, %304 : vector<8x128xf32>
    %307 = arith.divf %305, %306 : vector<8x128xf32>
    %308 = vector.extract_strided_slice %301 {offsets = [0, 128], sizes = [8, 128], strides = [1, 1]} : vector<8x512xf32> to vector<8x128xf32>
    %309 = arith.negf %308 : vector<8x128xf32>
    %310 = math.exp %309 : vector<8x128xf32>
    %cst_128 = arith.constant 1.000000e+00 : f32
    %311 = vector.broadcast %cst_128 : f32 to vector<8x128xf32>
    %312 = arith.addf %311, %310 : vector<8x128xf32>
    %313 = arith.divf %311, %312 : vector<8x128xf32>
    %314 = vector.extract_strided_slice %301 {offsets = [0, 256], sizes = [8, 128], strides = [1, 1]} : vector<8x512xf32> to vector<8x128xf32>
    %315 = math.tanh %314 : vector<8x128xf32>
    %316 = vector.extract_strided_slice %301 {offsets = [0, 384], sizes = [8, 128], strides = [1, 1]} : vector<8x512xf32> to vector<8x128xf32>
    %317 = arith.negf %316 : vector<8x128xf32>
    %318 = math.exp %317 : vector<8x128xf32>
    %cst_129 = arith.constant 1.000000e+00 : f32
    %319 = vector.broadcast %cst_129 : f32 to vector<8x128xf32>
    %320 = arith.addf %319, %318 : vector<8x128xf32>
    %321 = arith.divf %319, %320 : vector<8x128xf32>
    %c0_130 = arith.constant 0 : index
    %c0_131 = arith.constant 0 : index
    %322 = vector.load %arg10[%c0_130, %c0_131] : memref<8x128xf32, #tpu.memory_space<vmem>>, vector<8x128xf32>
    %323 = arith.mulf %313, %322 : vector<8x128xf32>
    %324 = arith.mulf %307, %315 : vector<8x128xf32>
    %325 = arith.addf %323, %324 : vector<8x128xf32>
    %326 = math.tanh %325 : vector<8x128xf32>
    %327 = arith.mulf %321, %326 : vector<8x128xf32>
    %328 = arith.truncf %327 : vector<8x128xf32> to vector<8x128xbf16>
    %c0_132 = arith.constant 0 : index
    %c0_133 = arith.constant 0 : index
    %329 = vector.load %arg10[%c0_132, %c0_133] : memref<8x128xf32, #tpu.memory_space<vmem>>, vector<8x128xf32>
    tpu.vector_store %arg10[%c0_132, %c0_133], %325 {strides = array<i32>} : memref<8x128xf32, #tpu.memory_space<vmem>>, vector<8x128xf32>,
    %c0_134 = arith.constant 0 : index
    %c0_135 = arith.constant 0 : index
    %330 = vector.load %arg9[%c0_134, %c0_135] : memref<8x128xbf16, #tpu.memory_space<vmem>>, vector<8x128xbf16>
    tpu.vector_store %arg9[%c0_134, %c0_135], %328 {strides = array<i32>} : memref<8x128xbf16, #tpu.memory_space<vmem>>, vector<8x128xbf16>,
    %c8_i32_136 = arith.constant 8 : i32
    %331 = arith.muli %arg1, %c8_i32_136 : i32
    %332 = arith.addi %331, %c6_i32 : i32
    %333 = vector.broadcast %332 : i32 to vector<8x1xi32>
    %334 = arith.cmpi slt, %333, %13 : vector<8x1xi32>
    %cst_137 = arith.constant 0.000000e+00 : bf16
    %335 = vector.broadcast %cst_137 : bf16 to vector<8x128xbf16>
    %336 = vector.shape_cast %334 : vector<8x1xi1> to vector<8x1xi1>
    %337 = vector.broadcast %336 : vector<8x1xi1> to vector<8x128xi1>
    %338 = arith.select %337, %328, %335 : vector<8x128xi1>, vector<8x128xbf16>
    %339 = arith.index_cast %c6_i32 : i32 to index
    %c0_138 = arith.constant 0 : index
    %c0_139 = arith.constant 0 : index
    %340 = vector.load %arg7[%339, %c0_138, %c0_139] : memref<8x8x128xbf16, #tpu.memory_space<vmem>>, vector<1x8x128xbf16>
    %341 = vector.shape_cast %340 : vector<1x8x128xbf16> to vector<8x128xbf16>
    %342 = vector.shape_cast %338 : vector<8x128xbf16> to vector<1x8x128xbf16>
    tpu.vector_store %arg7[%339, %c0_138, %c0_139], %342 {strides = array<i32>} : memref<8x8x128xbf16, #tpu.memory_space<vmem>>, vector<1x8x128xbf16>,
    %c7_i32 = arith.constant 7 : i32
    %343 = arith.index_cast %c7_i32 : i32 to index
    %c0_140 = arith.constant 0 : index
    %c0_141 = arith.constant 0 : index
    %344 = vector.load %arg8[%343, %c0_140, %c0_141] : memref<8x8x512xf32, #tpu.memory_space<vmem>>, vector<1x8x512xf32>
    %345 = vector.shape_cast %344 : vector<1x8x512xf32> to vector<8x512xf32>
    %c0_142 = arith.constant 0 : index
    %c0_143 = arith.constant 0 : index
    %346 = vector.load %arg9[%c0_142, %c0_143] : memref<8x128xbf16, #tpu.memory_space<vmem>>, vector<8x128xbf16>
    %cst_144 = arith.constant dense<0.000000e+00> : vector<8x512xf32>
    %347 = tpu.matmul %346, %12, %cst_144 {dimension_numbers = #tpu.dot_dimension_numbers<[1], [0], [0], [1], [0, 0, 1, 1], [], []>} : vector<8x128xbf16>, vector<128x512xbf16>, vector<8x512xf32> -> vector<8x512xf32>
    %348 = arith.addf %345, %347 : vector<8x512xf32>
    %349 = vector.extract_strided_slice %348 {offsets = [0, 0], sizes = [8, 128], strides = [1, 1]} : vector<8x512xf32> to vector<8x128xf32>
    %350 = arith.negf %349 : vector<8x128xf32>
    %351 = math.exp %350 : vector<8x128xf32>
    %cst_145 = arith.constant 1.000000e+00 : f32
    %352 = vector.broadcast %cst_145 : f32 to vector<8x128xf32>
    %353 = arith.addf %352, %351 : vector<8x128xf32>
    %354 = arith.divf %352, %353 : vector<8x128xf32>
    %355 = vector.extract_strided_slice %348 {offsets = [0, 128], sizes = [8, 128], strides = [1, 1]} : vector<8x512xf32> to vector<8x128xf32>
    %356 = arith.negf %355 : vector<8x128xf32>
    %357 = math.exp %356 : vector<8x128xf32>
    %cst_146 = arith.constant 1.000000e+00 : f32
    %358 = vector.broadcast %cst_146 : f32 to vector<8x128xf32>
    %359 = arith.addf %358, %357 : vector<8x128xf32>
    %360 = arith.divf %358, %359 : vector<8x128xf32>
    %361 = vector.extract_strided_slice %348 {offsets = [0, 256], sizes = [8, 128], strides = [1, 1]} : vector<8x512xf32> to vector<8x128xf32>
    %362 = math.tanh %361 : vector<8x128xf32>
    %363 = vector.extract_strided_slice %348 {offsets = [0, 384], sizes = [8, 128], strides = [1, 1]} : vector<8x512xf32> to vector<8x128xf32>
    %364 = arith.negf %363 : vector<8x128xf32>
    %365 = math.exp %364 : vector<8x128xf32>
    %cst_147 = arith.constant 1.000000e+00 : f32
    %366 = vector.broadcast %cst_147 : f32 to vector<8x128xf32>
    %367 = arith.addf %366, %365 : vector<8x128xf32>
    %368 = arith.divf %366, %367 : vector<8x128xf32>
    %c0_148 = arith.constant 0 : index
    %c0_149 = arith.constant 0 : index
    %369 = vector.load %arg10[%c0_148, %c0_149] : memref<8x128xf32, #tpu.memory_space<vmem>>, vector<8x128xf32>
    %370 = arith.mulf %360, %369 : vector<8x128xf32>
    %371 = arith.mulf %354, %362 : vector<8x128xf32>
    %372 = arith.addf %370, %371 : vector<8x128xf32>
    %373 = math.tanh %372 : vector<8x128xf32>
    %374 = arith.mulf %368, %373 : vector<8x128xf32>
    %375 = arith.truncf %374 : vector<8x128xf32> to vector<8x128xbf16>
    %c0_150 = arith.constant 0 : index
    %c0_151 = arith.constant 0 : index
    %376 = vector.load %arg10[%c0_150, %c0_151] : memref<8x128xf32, #tpu.memory_space<vmem>>, vector<8x128xf32>
    tpu.vector_store %arg10[%c0_150, %c0_151], %372 {strides = array<i32>} : memref<8x128xf32, #tpu.memory_space<vmem>>, vector<8x128xf32>,
    %c0_152 = arith.constant 0 : index
    %c0_153 = arith.constant 0 : index
    %377 = vector.load %arg9[%c0_152, %c0_153] : memref<8x128xbf16, #tpu.memory_space<vmem>>, vector<8x128xbf16>
    tpu.vector_store %arg9[%c0_152, %c0_153], %375 {strides = array<i32>} : memref<8x128xbf16, #tpu.memory_space<vmem>>, vector<8x128xbf16>,
    %c8_i32_154 = arith.constant 8 : i32
    %378 = arith.muli %arg1, %c8_i32_154 : i32
    %379 = arith.addi %378, %c7_i32 : i32
    %380 = vector.broadcast %379 : i32 to vector<8x1xi32>
    %381 = arith.cmpi slt, %380, %13 : vector<8x1xi32>
    %cst_155 = arith.constant 0.000000e+00 : bf16
    %382 = vector.broadcast %cst_155 : bf16 to vector<8x128xbf16>
    %383 = vector.shape_cast %381 : vector<8x1xi1> to vector<8x1xi1>
    %384 = vector.broadcast %383 : vector<8x1xi1> to vector<8x128xi1>
    %385 = arith.select %384, %375, %382 : vector<8x128xi1>, vector<8x128xbf16>
    %386 = arith.index_cast %c7_i32 : i32 to index
    %c0_156 = arith.constant 0 : index
    %c0_157 = arith.constant 0 : index
    %387 = vector.load %arg7[%386, %c0_156, %c0_157] : memref<8x8x128xbf16, #tpu.memory_space<vmem>>, vector<1x8x128xbf16>
    %388 = vector.shape_cast %387 : vector<1x8x128xbf16> to vector<8x128xbf16>
    %389 = vector.shape_cast %385 : vector<8x128xbf16> to vector<1x8x128xbf16>
    tpu.vector_store %arg7[%386, %c0_156, %c0_157], %389 {strides = array<i32>} : memref<8x8x128xbf16, #tpu.memory_space<vmem>>, vector<1x8x128xbf16>,
    %c8_i32_158 = arith.constant 8 : i32
    return
  }
  func.func @transform_0(%arg0: i32, %arg1: i32) -> (i32, i32, i32) {
    %c0_i32 = arith.constant 0 : i32
    %c0_i32_0 = arith.constant 0 : i32
    return %arg1, %arg0, %c0_i32 : i32, i32, i32
  }
  func.func @transform_1(%arg0: i32, %arg1: i32) -> (i32, i32) {
    %c0_i32 = arith.constant 0 : i32
    %c0_i32_0 = arith.constant 0 : i32
    %c0_i32_1 = arith.constant 0 : i32
    return %c0_i32, %c0_i32_0 : i32, i32
  }
  func.func @transform_2(%arg0: i32, %arg1: i32) -> (i32, i32) {
    %c0_i32 = arith.constant 0 : i32
    %c0_i32_0 = arith.constant 0 : i32
    %c0_i32_1 = arith.constant 0 : i32
    return %c0_i32, %c0_i32_0 : i32, i32
  }
  func.func @transform_3(%arg0: i32, %arg1: i32) -> (i32, i32) {
    %c0_i32 = arith.constant 0 : i32
    %c0_i32_0 = arith.constant 0 : i32
    %c0_i32_1 = arith.constant 0 : i32
    return %c0_i32, %c0_i32_0 : i32, i32
  }
  func.func @transform_4(%arg0: i32, %arg1: i32) -> (i32, i32) {
    %c0_i32 = arith.constant 0 : i32
    %c0_i32_0 = arith.constant 0 : i32
    return %arg0, %c0_i32 : i32, i32
  }
  func.func @transform_5(%arg0: i32, %arg1: i32) -> (i32, i32, i32) {
    %c0_i32 = arith.constant 0 : i32
    %c0_i32_0 = arith.constant 0 : i32
    return %arg1, %arg0, %c0_i32 : i32, i32, i32
  }
}

</mosaic_0001>

<llo_original>
// kernel: tpu_custom_call.1
$region0: #{tpu_custom_call.1}
  #allocation0 [shape = 'u32[]', space=smem, size = 0x4, offset = 0x4, fixed_abs, tag = 'smem constant byte address 0x4 - core index']
  #allocation1 [shape = 'u32[72,128]{1,0:T(1,128)}', space=vmem, size = 0x9000, scoped, tag = 'internal scratch']
  #allocation2 [shape = 'f32[8,8,512]{2,1,0:T(8,128)}', space=vmem, size = 0x20000, scoped, tag = 'scratch operand']
  #allocation3 [shape = 'bf16[8,128]{1,0:T(8,128)(2,1)}', space=vmem, size = 0x800, scoped, tag = 'scratch operand']
  #allocation4 [shape = 'f32[8,128]{1,0:T(8,128)}', space=vmem, size = 0x1000, scoped, tag = 'scratch operand']
  %s0 = inlined_call_operand.hbm [shape: bf16[8,8,128], index: 0, kind: input, shape index: {}]
  %s1 = inlined_call_operand.hbm [shape: bf16[128,512], index: 1, kind: input, shape index: {}]
  %s2 = inlined_call_operand.hbm [shape: bf16[128,512], index: 2, kind: input, shape index: {}]
  %s3 = inlined_call_operand.vmem [shape: f32[1,512], index: 3, kind: input, shape index: {}]
  %s4 = inlined_call_operand.vmem [shape: s32[8,1], index: 4, kind: input, shape index: {}]
  %s5 = inlined_call_operand.hbm [shape: bf16[8,8,128], index: 5, kind: output, shape index: {}]
  %s6 = sld [smem:[#allocation0]]
  $region46: #{tpu_custom_call.1} parent=0
    _
  %s8 = ssub.s32 1, %s6
  %s9 = scalar_select 0, %s8, %s6
  $region1: #{tpu_custom_call.1} parent=0
    #allocation5 [shape = 'u8[16384]{0}', space=vmem, size = 0x4000, scoped, tag = 'input window, operand 0, single buffered']
    #allocation6 [shape = 's32[1]{0}', space=sflag, size = 0x4, scoped, tag = 'scoped memory for tpu_custom_call.1']
    #allocation7 [shape = 's32[1]{0}', space=sflag, size = 0x4, scoped, tag = 'scoped memory for tpu_custom_call.1']
    #allocation8 [shape = 'u8[131072]{0}', space=vmem, size = 0x20000, scoped, tag = 'input window, operand 1, single buffered']
    #allocation9 [shape = 's32[1]{0}', space=sflag, size = 0x4, scoped, tag = 'scoped memory for tpu_custom_call.1']
    #allocation10 [shape = 'u8[131072]{0}', space=vmem, size = 0x20000, scoped, tag = 'input window, operand 2, single buffered']
    #allocation11 [shape = 'u8[16384]{0}', space=vmem, size = 0x4000, scoped, tag = 'output window, operand 0, single buffered']
    %10 = vsyncpa [#allocation6], 0
    %11 = vsyncpa [#allocation9], 0
    %12 = vsyncpa [#allocation7], 0
    // Predicated region
    $region2: #{tpu_custom_call.1} parent=1 // pred_check
      _
    $region3: #{tpu_custom_call.1} parent=1 // pred_check_branch
      %14 = sbr.rel (0) target = $region5
    $region4: #{tpu_custom_call.1} parent=1 // pred_region
      %16 = vsyncadd [#allocation6], 0
      %s17 = sshll.u32 %s0, 4
      %s18 = int_to_ptr.hbm [resolvable:$true] %s17
      %s19 = sshll.u32 [#allocation5], 4
      %s20 = int_to_ptr.vmem [resolvable:$true] %s19
      %25 = dma.hbm_to_vmem [thread:$0]  %s18, 512, %s20, [#allocation6], 64, 64, 4
    $region5: #{tpu_custom_call.1} parent=1 // pred_fallthru
      _
    // Predicated region
    $region6: #{tpu_custom_call.1} parent=1 // pred_check
      _
    $region7: #{tpu_custom_call.1} parent=1 // pred_check_branch
      %27 = sbr.rel (0) target = $region9
    $region8: #{tpu_custom_call.1} parent=1 // pred_region
      %29 = vsyncadd [#allocation9], 0
      %s30 = sshll.u32 %s1, 4
      %s31 = int_to_ptr.hbm [resolvable:$true] %s30
      %s32 = sshll.u32 [#allocation8], 4
      %s33 = int_to_ptr.vmem [resolvable:$true] %s32
      %38 = dma.hbm_to_vmem [thread:$0]  %s31, 4096, %s33, [#allocation9], 256, 256, 16
    $region9: #{tpu_custom_call.1} parent=1 // pred_fallthru
      _
    // Predicated region
    $region10: #{tpu_custom_call.1} parent=1 // pred_check
      _
    $region11: #{tpu_custom_call.1} parent=1 // pred_check_branch
      %40 = sbr.rel (0) target = $region13
    $region12: #{tpu_custom_call.1} parent=1 // pred_region
      %42 = vsyncadd [#allocation9], 0
      %s43 = sshll.u32 %s2, 4
      %s44 = int_to_ptr.hbm [resolvable:$true] %s43
      %s45 = sshll.u32 [#allocation10], 4
      %s46 = int_to_ptr.vmem [resolvable:$true] %s45
      %51 = dma.hbm_to_vmem [thread:$0]  %s44, 4096, %s46, [#allocation9], 256, 256, 16
    $region13: #{tpu_custom_call.1} parent=1 // pred_fallthru
      _
    // Predicated region
    $region14: #{tpu_custom_call.1} parent=1 // pred_check
      _
    $region15: #{tpu_custom_call.1} parent=1 // pred_check_branch
      %53 = sbr.rel (0) target = $region17
    $region16: #{tpu_custom_call.1} parent=1 // pred_region
      _
    $region17: #{tpu_custom_call.1} parent=1 // pred_fallthru
      _
    // Predicated region
    $region18: #{tpu_custom_call.1} parent=1 // pred_check
      _
    $region19: #{tpu_custom_call.1} parent=1 // pred_check_branch
      %55 = sbr.rel (0) target = $region21
    $region20: #{tpu_custom_call.1} parent=1 // pred_region
      _
    $region21: #{tpu_custom_call.1} parent=1 // pred_fallthru
      _
    // Predicated region
    $region22: #{tpu_custom_call.1} parent=1 // pred_check
      _
    $region23: #{tpu_custom_call.1} parent=1 // pred_check_branch
      %57 = sbr.rel (0) target = $region25
    $region24: #{tpu_custom_call.1} parent=1 // pred_region
      %59 = dma.done [#allocation6], 512
    $region25: #{tpu_custom_call.1} parent=1 // pred_fallthru
      _
    // Predicated region
    $region26: #{tpu_custom_call.1} parent=1 // pred_check
      _
    $region27: #{tpu_custom_call.1} parent=1 // pred_check_branch
      %61 = sbr.rel (0) target = $region29
    $region28: #{tpu_custom_call.1} parent=1 // pred_region
      %63 = dma.done [#allocation9], 4096
    $region29: #{tpu_custom_call.1} parent=1 // pred_fallthru
      _
    // Predicated region
    $region30: #{tpu_custom_call.1} parent=1 // pred_check
      _
    $region31: #{tpu_custom_call.1} parent=1 // pred_check_branch
      %65 = sbr.rel (0) target = $region33
    $region32: #{tpu_custom_call.1} parent=1 // pred_region
      %67 = dma.done [#allocation9], 4096
    $region33: #{tpu_custom_call.1} parent=1 // pred_fallthru
      _
    %p69 = scmp.eq.s32.totalorder 0, 0
    // Predicated region
    $region34: #{tpu_custom_call.1} parent=1 // pred_check
      %p70 = pneg %p69
    $region35: #{tpu_custom_call.1} parent=1 // pred_check_branch
      %72 = sbr.rel (%p70) target = $region37
    $region36: #{tpu_custom_call.1} parent=1 // pred_region
      %73 = vst [vmem:[#allocation3] sm:$0xf] 0
      %74 = vst [vmem:[#allocation4] sm:$0xff] 0.0
    $region37: #{tpu_custom_call.1} parent=1 // pred_fallthru
      _
    %v75 = vld [vmem:[#allocation5] sm:$0xf]
    %v76 = vld [vmem:[#allocation5 + $0x4] sm:$0xf]
    %v77 = vld [vmem:[#allocation5 + $0x8] sm:$0xf]
    %v78 = vld [vmem:[#allocation5 + $0xc] sm:$0xf]
    %v79 = vld [vmem:[#allocation5 + $0x10] sm:$0xf]
    %v80 = vld [vmem:[#allocation5 + $0x14] sm:$0xf]
    %v81 = vld [vmem:[#allocation5 + $0x18] sm:$0xf]
    %v82 = vld [vmem:[#allocation5 + $0x1c] sm:$0xf]
    %v83 = vld [vmem:[#allocation8] sm:$0xff]
    %v84 = vld [vmem:[#allocation8 + $0x8] sm:$0xff]
    %v85 = vld [vmem:[#allocation8 + $0x10] sm:$0xff]
    %v86 = vld [vmem:[#allocation8 + $0x18] sm:$0xff]
    %v87 = vld [vmem:[#allocation8 + $0x20] sm:$0xff]
    %v88 = vld [vmem:[#allocation8 + $0x28] sm:$0xff]
    %v89 = vld [vmem:[#allocation8 + $0x30] sm:$0xff]
    %v90 = vld [vmem:[#allocation8 + $0x38] sm:$0xff]
    %v91 = vld [vmem:[#allocation8 + $0x40] sm:$0xff]
    %v92 = vld [vmem:[#allocation8 + $0x48] sm:$0xff]
    %v93 = vld [vmem:[#allocation8 + $0x50] sm:$0xff]
    %v94 = vld [vmem:[#allocation8 + $0x58] sm:$0xff]
    %v95 = vld [vmem:[#allocation8 + $0x60] sm:$0xff]
    %v96 = vld [vmem:[#allocation8 + $0x68] sm:$0xff]
    %v97 = vld [vmem:[#allocation8 + $0x70] sm:$0xff]
    %v98 = vld [vmem:[#allocation8 + $0x78] sm:$0xff]
    %v99 = vld [vmem:[#allocation8 + $0x80] sm:$0xff]
    %v100 = vld [vmem:[#allocation8 + $0x88] sm:$0xff]
    %v101 = vld [vmem:[#allocation8 + $0x90] sm:$0xff]
    %v102 = vld [vmem:[#allocation8 + $0x98] sm:$0xff]
    %v103 = vld [vmem:[#allocation8 + $0xa0] sm:$0xff]
    %v104 = vld [vmem:[#allocation8 + $0xa8] sm:$0xff]
    %v105 = vld [vmem:[#allocation8 + $0xb0] sm:$0xff]
    %v106 = vld [vmem:[#allocation8 + $0xb8] sm:$0xff]
    %v107 = vld [vmem:[#allocation8 + $0xc0] sm:$0xff]
    %v108 = vld [vmem:[#allocation8 + $0xc8] sm:$0xff]
    %v109 = vld [vmem:[#allocation8 + $0xd0] sm:$0xff]
    %v110 = vld [vmem:[#allocation8 + $0xd8] sm:$0xff]
    %v111 = vld [vmem:[#allocation8 + $0xe0] sm:$0xff]
    %v112 = vld [vmem:[#allocation8 + $0xe8] sm:$0xff]
    %v113 = vld [vmem:[#allocation8 + $0xf0] sm:$0xff]
    %v114 = vld [vmem:[#allocation8 + $0xf8] sm:$0xff]
    %v115 = vld [vmem:[%s3] sm:$0xf]
    %v117 = vperm.slane %v115, 0
    %v118 = vperm.slane %v115, 1
    %v119 = vperm.slane %v115, 2
    %v120 = vperm.slane %v115, 3
    %v133 = vunpack.c.l.b16 %v75
    %v134 = vunpack.c.l.b16 %v76
    %v135 = vunpack.c.l.b16 %v77
    %v136 = vunpack.c.l.b16 %v78
    %v137 = vunpack.c.l.b16 %v79
    %v138 = vunpack.c.l.b16 %v80
    %v139 = vunpack.c.l.b16 %v81
    %v140 = vunpack.c.l.b16 %v82
    %v141 = vpack.c.b16 %v134, %v133
    %v142 = vpack.c.b16 %v136, %v135
    %v143 = vpack.c.b16 %v138, %v137
    %v144 = vpack.c.b16 %v140, %v139
    %v181 = vunpack.c.l.b16 %v83
    %v182 = vunpack.c.h.b16 %v83
    %v183 = vunpack.c.l.b16 %v84
    %v184 = vunpack.c.h.b16 %v84
    %v185 = vunpack.c.l.b16 %v85
    %v186 = vunpack.c.h.b16 %v85
    %v187 = vunpack.c.l.b16 %v86
    %v188 = vunpack.c.h.b16 %v86
    %v189 = vunpack.c.l.b16 %v87
    %v190 = vunpack.c.h.b16 %v87
    %v191 = vunpack.c.l.b16 %v88
    %v192 = vunpack.c.h.b16 %v88
    %v193 = vunpack.c.l.b16 %v89
    %v194 = vunpack.c.h.b16 %v89
    %v195 = vunpack.c.l.b16 %v90
    %v196 = vunpack.c.h.b16 %v90
    %v197 = vunpack.c.l.b16 %v91
    %v198 = vunpack.c.h.b16 %v91
    %v199 = vunpack.c.l.b16 %v92
    %v200 = vunpack.c.h.b16 %v92
    %v201 = vunpack.c.l.b16 %v93
    %v202 = vunpack.c.h.b16 %v93
    %v203 = vunpack.c.l.b16 %v94
    %v204 = vunpack.c.h.b16 %v94
    %v205 = vunpack.c.l.b16 %v95
    %v206 = vunpack.c.h.b16 %v95
    %v207 = vunpack.c.l.b16 %v96
    %v208 = vunpack.c.h.b16 %v96
    %v209 = vunpack.c.l.b16 %v97
    %v210 = vunpack.c.h.b16 %v97
    %v211 = vunpack.c.l.b16 %v98
    %v212 = vunpack.c.h.b16 %v98
    %v213 = vunpack.c.l.b16 %v99
    %v214 = vunpack.c.h.b16 %v99
    %v215 = vunpack.c.l.b16 %v100
    %v216 = vunpack.c.h.b16 %v100
    %v217 = vunpack.c.l.b16 %v101
    %v218 = vunpack.c.h.b16 %v101
    %v219 = vunpack.c.l.b16 %v102
    %v220 = vunpack.c.h.b16 %v102
    %v221 = vunpack.c.l.b16 %v103
    %v222 = vunpack.c.h.b16 %v103
    %v223 = vunpack.c.l.b16 %v104
    %v224 = vunpack.c.h.b16 %v104
    %v225 = vunpack.c.l.b16 %v105
    %v226 = vunpack.c.h.b16 %v105
    %v227 = vunpack.c.l.b16 %v106
    %v228 = vunpack.c.h.b16 %v106
    %v229 = vunpack.c.l.b16 %v107
    %v230 = vunpack.c.h.b16 %v107
    %v231 = vunpack.c.l.b16 %v108
    %v232 = vunpack.c.h.b16 %v108
    %v233 = vunpack.c.l.b16 %v109
    %v234 = vunpack.c.h.b16 %v109
    %v235 = vunpack.c.l.b16 %v110
    %v236 = vunpack.c.h.b16 %v110
    %v237 = vunpack.c.l.b16 %v111
    %v238 = vunpack.c.h.b16 %v111
    %v239 = vunpack.c.l.b16 %v112
    %v240 = vunpack.c.h.b16 %v112
    %v241 = vunpack.c.l.b16 %v113
    %v242 = vunpack.c.h.b16 %v113
    %v243 = vunpack.c.l.b16 %v114
    %v244 = vunpack.c.h.b16 %v114
    %v245 = vpack.c.b16 %v185, %v181
    %v246 = vpack.c.b16 %v186, %v182
    %v247 = vpack.c.b16 %v187, %v183
    %v248 = vpack.c.b16 %v188, %v184
    %v249 = vpack.c.b16 %v193, %v189
    %v250 = vpack.c.b16 %v194, %v190
    %v251 = vpack.c.b16 %v195, %v191
    %v252 = vpack.c.b16 %v196, %v192
    %v253 = vpack.c.b16 %v201, %v197
    %v254 = vpack.c.b16 %v202, %v198
    %v255 = vpack.c.b16 %v203, %v199
    %v256 = vpack.c.b16 %v204, %v200
    %v257 = vpack.c.b16 %v209, %v205
    %v258 = vpack.c.b16 %v210, %v206
    %v259 = vpack.c.b16 %v211, %v207
    %v260 = vpack.c.b16 %v212, %v208
    %v261 = vpack.c.b16 %v217, %v213
    %v262 = vpack.c.b16 %v218, %v214
    %v263 = vpack.c.b16 %v219, %v215
    %v264 = vpack.c.b16 %v220, %v216
    %v265 = vpack.c.b16 %v225, %v221
    %v266 = vpack.c.b16 %v226, %v222
    %v267 = vpack.c.b16 %v227, %v223
    %v268 = vpack.c.b16 %v228, %v224
    %v269 = vpack.c.b16 %v233, %v229
    %v270 = vpack.c.b16 %v234, %v230
    %v271 = vpack.c.b16 %v235, %v231
    %v272 = vpack.c.b16 %v236, %v232
    %v273 = vpack.c.b16 %v241, %v237
    %v274 = vpack.c.b16 %v242, %v238
    %v275 = vpack.c.b16 %v243, %v239
    %v276 = vpack.c.b16 %v244, %v240
    %309 = vmatpush.bf16.msra.mxu0 %v273
    %310 = vmatpush.bf16.msra.mxu0 %v269
    %311 = vmatpush.bf16.msra.mxu0 %v265
    %312 = vmatpush.bf16.msra.mxu0 %v261
    %313 = vmatpush.bf16.msra.mxu0 %v257
    %314 = vmatpush.bf16.msra.mxu0 %v253
    %315 = vmatpush.bf16.msra.mxu0 %v249
    %316 = vmatpush.bf16.msra.mxu0 %v245
    %317 = vmatmul.bf16.gmra.mxu0 %v141
    %v318 = vpop.f32.mrf.mxu0
    %v319 = vadd.f32 %v117, %v318
    %v320 = vpop.f32.mrf.mxu0
    %v321 = vadd.f32 %v117, %v320
    %322 = vmatmul.bf16.gmra.mxu0 %v142
    %v323 = vpop.f32.mrf.mxu0
    %v324 = vadd.f32 %v117, %v323
    %v325 = vpop.f32.mrf.mxu0
    %v326 = vadd.f32 %v117, %v325
    %327 = vmatmul.bf16.gmra.mxu0 %v143
    %v328 = vpop.f32.mrf.mxu0
    %v329 = vadd.f32 %v117, %v328
    %v330 = vpop.f32.mrf.mxu0
    %v331 = vadd.f32 %v117, %v330
    %332 = vmatmul.bf16.gmra.mxu0 %v144
    %v333 = vpop.f32.mrf.mxu0
    %v334 = vadd.f32 %v117, %v333
    %v335 = vpop.f32.mrf.mxu0
    %v336 = vadd.f32 %v117, %v335
    %337 = vdwg.mxu0
    %338 = vmatpush.bf16.msra.mxu0 %v274
    %339 = vmatpush.bf16.msra.mxu0 %v270
    %340 = vmatpush.bf16.msra.mxu0 %v266
    %341 = vmatpush.bf16.msra.mxu0 %v262
    %342 = vmatpush.bf16.msra.mxu0 %v258
    %343 = vmatpush.bf16.msra.mxu0 %v254
    %344 = vmatpush.bf16.msra.mxu0 %v250
    %345 = vmatpush.bf16.msra.mxu0 %v246
    %346 = vmatmul.bf16.gmra.mxu0 %v141
    %v347 = vpop.f32.mrf.mxu0
    %v348 = vadd.f32 %v118, %v347
    %v349 = vpop.f32.mrf.mxu0
    %v350 = vadd.f32 %v118, %v349
    %351 = vmatmul.bf16.gmra.mxu0 %v142
    %v352 = vpop.f32.mrf.mxu0
    %v353 = vadd.f32 %v118, %v352
    %v354 = vpop.f32.mrf.mxu0
    %v355 = vadd.f32 %v118, %v354
    %356 = vmatmul.bf16.gmra.mxu0 %v143
    %v357 = vpop.f32.mrf.mxu0
    %v358 = vadd.f32 %v118, %v357
    %v359 = vpop.f32.mrf.mxu0
    %v360 = vadd.f32 %v118, %v359
    %361 = vmatmul.bf16.gmra.mxu0 %v144
    %v362 = vpop.f32.mrf.mxu0
    %v363 = vadd.f32 %v118, %v362
    %v364 = vpop.f32.mrf.mxu0
    %v365 = vadd.f32 %v118, %v364
    %366 = vdwg.mxu0
    %367 = vmatpush.bf16.msra.mxu0 %v275
    %368 = vmatpush.bf16.msra.mxu0 %v271
    %369 = vmatpush.bf16.msra.mxu0 %v267
    %370 = vmatpush.bf16.msra.mxu0 %v263
    %371 = vmatpush.bf16.msra.mxu0 %v259
    %372 = vmatpush.bf16.msra.mxu0 %v255
    %373 = vmatpush.bf16.msra.mxu0 %v251
    %374 = vmatpush.bf16.msra.mxu0 %v247
    %375 = vmatmul.bf16.gmra.mxu0 %v141
    %v376 = vpop.f32.mrf.mxu0
    %v377 = vadd.f32 %v119, %v376
    %v378 = vpop.f32.mrf.mxu0
    %v379 = vadd.f32 %v119, %v378
    %380 = vmatmul.bf16.gmra.mxu0 %v142
    %v381 = vpop.f32.mrf.mxu0
    %v382 = vadd.f32 %v119, %v381
    %v383 = vpop.f32.mrf.mxu0
    %v384 = vadd.f32 %v119, %v383
    %385 = vmatmul.bf16.gmra.mxu0 %v143
    %v386 = vpop.f32.mrf.mxu0
    %v387 = vadd.f32 %v119, %v386
    %v388 = vpop.f32.mrf.mxu0
    %v389 = vadd.f32 %v119, %v388
    %390 = vmatmul.bf16.gmra.mxu0 %v144
    %v391 = vpop.f32.mrf.mxu0
    %v392 = vadd.f32 %v119, %v391
    %v393 = vpop.f32.mrf.mxu0
    %v394 = vadd.f32 %v119, %v393
    %395 = vdwg.mxu0
    %396 = vmatpush.bf16.msra.mxu0 %v276
    %397 = vmatpush.bf16.msra.mxu0 %v272
    %398 = vmatpush.bf16.msra.mxu0 %v268
    %399 = vmatpush.bf16.msra.mxu0 %v264
    %400 = vmatpush.bf16.msra.mxu0 %v260
    %401 = vmatpush.bf16.msra.mxu0 %v256
    %402 = vmatpush.bf16.msra.mxu0 %v252
    %403 = vmatpush.bf16.msra.mxu0 %v248
    %404 = vmatmul.bf16.gmra.mxu0 %v141
    %v405 = vpop.f32.mrf.mxu0
    %v406 = vadd.f32 %v120, %v405
    %v407 = vpop.f32.mrf.mxu0
    %v408 = vadd.f32 %v120, %v407
    %409 = vmatmul.bf16.gmra.mxu0 %v142
    %v410 = vpop.f32.mrf.mxu0
    %v411 = vadd.f32 %v120, %v410
    %v412 = vpop.f32.mrf.mxu0
    %v413 = vadd.f32 %v120, %v412
    %414 = vmatmul.bf16.gmra.mxu0 %v143
    %v415 = vpop.f32.mrf.mxu0
    %v416 = vadd.f32 %v120, %v415
    %v417 = vpop.f32.mrf.mxu0
    %v418 = vadd.f32 %v120, %v417
    %419 = vmatmul.bf16.gmra.mxu0 %v144
    %v420 = vpop.f32.mrf.mxu0
    %v421 = vadd.f32 %v120, %v420
    %v422 = vpop.f32.mrf.mxu0
    %v423 = vadd.f32 %v120, %v422
    %424 = vdwg.mxu0
    %425 = vst [vmem:[#allocation2] sm:$0xff] %v319
    %426 = vst [vmem:[#allocation2 + $0x8] sm:$0xff] %v348
    %427 = vst [vmem:[#allocation2 + $0x10] sm:$0xff] %v377
    %428 = vst [vmem:[#allocation2 + $0x18] sm:$0xff] %v406
    %429 = vst [vmem:[#allocation2 + $0x20] sm:$0xff] %v321
    %430 = vst [vmem:[#allocation2 + $0x28] sm:$0xff] %v350
    %431 = vst [vmem:[#allocation2 + $0x30] sm:$0xff] %v379
    %432 = vst [vmem:[#allocation2 + $0x38] sm:$0xff] %v408
    %433 = vst [vmem:[#allocation2 + $0x40] sm:$0xff] %v324
    %434 = vst [vmem:[#allocation2 + $0x48] sm:$0xff] %v353
    %435 = vst [vmem:[#allocation2 + $0x50] sm:$0xff] %v382
    %436 = vst [vmem:[#allocation2 + $0x58] sm:$0xff] %v411
    %437 = vst [vmem:[#allocation2 + $0x60] sm:$0xff] %v326
    %438 = vst [vmem:[#allocation2 + $0x68] sm:$0xff] %v355
    %439 = vst [vmem:[#allocation2 + $0x70] sm:$0xff] %v384
    %440 = vst [vmem:[#allocation2 + $0x78] sm:$0xff] %v413
    %441 = vst [vmem:[#allocation2 + $0x80] sm:$0xff] %v329
    %442 = vst [vmem:[#allocation2 + $0x88] sm:$0xff] %v358
    %443 = vst [vmem:[#allocation2 + $0x90] sm:$0xff] %v387
    %444 = vst [vmem:[#allocation2 + $0x98] sm:$0xff] %v416
    %445 = vst [vmem:[#allocation2 + $0xa0] sm:$0xff] %v331
    %446 = vst [vmem:[#allocation2 + $0xa8] sm:$0xff] %v360
    %447 = vst [vmem:[#allocation2 + $0xb0] sm:$0xff] %v389
    %448 = vst [vmem:[#allocation2 + $0xb8] sm:$0xff] %v418
    %449 = vst [vmem:[#allocation2 + $0xc0] sm:$0xff] %v334
    %450 = vst [vmem:[#allocation2 + $0xc8] sm:$0xff] %v363
    %451 = vst [vmem:[#allocation2 + $0xd0] sm:$0xff] %v392
    %452 = vst [vmem:[#allocation2 + $0xd8] sm:$0xff] %v421
    %453 = vst [vmem:[#allocation2 + $0xe0] sm:$0xff] %v336
    %454 = vst [vmem:[#allocation2 + $0xe8] sm:$0xff] %v365
    %455 = vst [vmem:[#allocation2 + $0xf0] sm:$0xff] %v394
    %456 = vst [vmem:[#allocation2 + $0xf8] sm:$0xff] %v423
    %v457 = vld [vmem:[#allocation10] sm:$0xff]
    %v458 = vld [vmem:[#allocation10 + $0x8] sm:$0xff]
    %v459 = vld [vmem:[#allocation10 + $0x10] sm:$0xff]
    %v460 = vld [vmem:[#allocation10 + $0x18] sm:$0xff]
    %v461 = vld [vmem:[#allocation10 + $0x20] sm:$0xff]
    %v462 = vld [vmem:[#allocation10 + $0x28] sm:$0xff]
    %v463 = vld [vmem:[#allocation10 + $0x30] sm:$0xff]
    %v464 = vld [vmem:[#allocation10 + $0x38] sm:$0xff]
    %v465 = vld [vmem:[#allocation10 + $0x40] sm:$0xff]
    %v466 = vld [vmem:[#allocation10 + $0x48] sm:$0xff]
    %v467 = vld [vmem:[#allocation10 + $0x50] sm:$0xff]
    %v468 = vld [vmem:[#allocation10 + $0x58] sm:$0xff]
    %v469 = vld [vmem:[#allocation10 + $0x60] sm:$0xff]
    %v470 = vld [vmem:[#allocation10 + $0x68] sm:$0xff]
    %v471 = vld [vmem:[#allocation10 + $0x70] sm:$0xff]
    %v472 = vld [vmem:[#allocation10 + $0x78] sm:$0xff]
    %v473 = vld [vmem:[#allocation10 + $0x80] sm:$0xff]
    %v474 = vld [vmem:[#allocation10 + $0x88] sm:$0xff]
    %v475 = vld [vmem:[#allocation10 + $0x90] sm:$0xff]
    %v476 = vld [vmem:[#allocation10 + $0x98] sm:$0xff]
    %v477 = vld [vmem:[#allocation10 + $0xa0] sm:$0xff]
    %v478 = vld [vmem:[#allocation10 + $0xa8] sm:$0xff]
    %v479 = vld [vmem:[#allocation10 + $0xb0] sm:$0xff]
    %v480 = vld [vmem:[#allocation10 + $0xb8] sm:$0xff]
    %v481 = vld [vmem:[#allocation10 + $0xc0] sm:$0xff]
    %v482 = vld [vmem:[#allocation10 + $0xc8] sm:$0xff]
    %v483 = vld [vmem:[#allocation10 + $0xd0] sm:$0xff]
    %v484 = vld [vmem:[#allocation10 + $0xd8] sm:$0xff]
    %v485 = vld [vmem:[#allocation10 + $0xe0] sm:$0xff]
    %v486 = vld [vmem:[#allocation10 + $0xe8] sm:$0xff]
    %v487 = vld [vmem:[#allocation10 + $0xf0] sm:$0xff]
    %v488 = vld [vmem:[#allocation10 + $0xf8] sm:$0xff]
    %v489 = vld [vmem:[%s4] sm:$0xff]
    %v490 = vld [vmem:[#allocation2] sm:$0xff]
    %v491 = vld [vmem:[#allocation2 + $0x8] sm:$0xff]
    %v492 = vld [vmem:[#allocation2 + $0x10] sm:$0xff]
    %v493 = vld [vmem:[#allocation2 + $0x18] sm:$0xff]
    %v494 = vld [vmem:[#allocation3] sm:$0xf]
    %v527 = vunpack.c.l.b16 %v457
    %v528 = vunpack.c.h.b16 %v457
    %v529 = vunpack.c.l.b16 %v458
    %v530 = vunpack.c.h.b16 %v458
    %v531 = vunpack.c.l.b16 %v459
    %v532 = vunpack.c.h.b16 %v459
    %v533 = vunpack.c.l.b16 %v460
    %v534 = vunpack.c.h.b16 %v460
    %v535 = vunpack.c.l.b16 %v461
    %v536 = vunpack.c.h.b16 %v461
    %v537 = vunpack.c.l.b16 %v462
    %v538 = vunpack.c.h.b16 %v462
    %v539 = vunpack.c.l.b16 %v463
    %v540 = vunpack.c.h.b16 %v463
    %v541 = vunpack.c.l.b16 %v464
    %v542 = vunpack.c.h.b16 %v464
    %v543 = vunpack.c.l.b16 %v465
    %v544 = vunpack.c.h.b16 %v465
    %v545 = vunpack.c.l.b16 %v466
    %v546 = vunpack.c.h.b16 %v466
    %v547 = vunpack.c.l.b16 %v467
    %v548 = vunpack.c.h.b16 %v467
    %v549 = vunpack.c.l.b16 %v468
    %v550 = vunpack.c.h.b16 %v468
    %v551 = vunpack.c.l.b16 %v469
    %v552 = vunpack.c.h.b16 %v469
    %v553 = vunpack.c.l.b16 %v470
    %v554 = vunpack.c.h.b16 %v470
    %v555 = vunpack.c.l.b16 %v471
    %v556 = vunpack.c.h.b16 %v471
    %v557 = vunpack.c.l.b16 %v472
    %v558 = vunpack.c.h.b16 %v472
    %v559 = vunpack.c.l.b16 %v473
    %v560 = vunpack.c.h.b16 %v473
    %v561 = vunpack.c.l.b16 %v474
    %v562 = vunpack.c.h.b16 %v474
    %v563 = vunpack.c.l.b16 %v475
    %v564 = vunpack.c.h.b16 %v475
    %v565 = vunpack.c.l.b16 %v476
    %v566 = vunpack.c.h.b16 %v476
    %v567 = vunpack.c.l.b16 %v477
    %v568 = vunpack.c.h.b16 %v477
    %v569 = vunpack.c.l.b16 %v478
    %v570 = vunpack.c.h.b16 %v478
    %v571 = vunpack.c.l.b16 %v479
    %v572 = vunpack.c.h.b16 %v479
    %v573 = vunpack.c.l.b16 %v480
    %v574 = vunpack.c.h.b16 %v480
    %v575 = vunpack.c.l.b16 %v481
    %v576 = vunpack.c.h.b16 %v481
    %v577 = vunpack.c.l.b16 %v482
    %v578 = vunpack.c.h.b16 %v482
    %v579 = vunpack.c.l.b16 %v483
    %v580 = vunpack.c.h.b16 %v483
    %v581 = vunpack.c.l.b16 %v484
    %v582 = vunpack.c.h.b16 %v484
    %v583 = vunpack.c.l.b16 %v485
    %v584 = vunpack.c.h.b16 %v485
    %v585 = vunpack.c.l.b16 %v486
    %v586 = vunpack.c.h.b16 %v486
    %v587 = vunpack.c.l.b16 %v487
    %v588 = vunpack.c.h.b16 %v487
    %v589 = vunpack.c.l.b16 %v488
    %v590 = vunpack.c.h.b16 %v488
    %v591 = vpack.c.b16 %v531, %v527
    %v592 = vpack.c.b16 %v532, %v528
    %v593 = vpack.c.b16 %v533, %v529
    %v594 = vpack.c.b16 %v534, %v530
    %v595 = vpack.c.b16 %v539, %v535
    %v596 = vpack.c.b16 %v540, %v536
    %v597 = vpack.c.b16 %v541, %v537
    %v598 = vpack.c.b16 %v542, %v538
    %v599 = vpack.c.b16 %v547, %v543
    %v600 = vpack.c.b16 %v548, %v544
    %v601 = vpack.c.b16 %v549, %v545
    %v602 = vpack.c.b16 %v550, %v546
    %v603 = vpack.c.b16 %v555, %v551
    %v604 = vpack.c.b16 %v556, %v552
    %v605 = vpack.c.b16 %v557, %v553
    %v606 = vpack.c.b16 %v558, %v554
    %v607 = vpack.c.b16 %v563, %v559
    %v608 = vpack.c.b16 %v564, %v560
    %v609 = vpack.c.b16 %v565, %v561
    %v610 = vpack.c.b16 %v566, %v562
    %v611 = vpack.c.b16 %v571, %v567
    %v612 = vpack.c.b16 %v572, %v568
    %v613 = vpack.c.b16 %v573, %v569
    %v614 = vpack.c.b16 %v574, %v570
    %v615 = vpack.c.b16 %v579, %v575
    %v616 = vpack.c.b16 %v580, %v576
    %v617 = vpack.c.b16 %v581, %v577
    %v618 = vpack.c.b16 %v582, %v578
    %v619 = vpack.c.b16 %v587, %v583
    %v620 = vpack.c.b16 %v588, %v584
    %v621 = vpack.c.b16 %v589, %v585
    %v622 = vpack.c.b16 %v590, %v586
    %655 = vmatpush.bf16.msra.mxu0 %v619
    %656 = vmatpush.bf16.msra.mxu0 %v615
    %657 = vmatpush.bf16.msra.mxu0 %v611
    %658 = vmatpush.bf16.msra.mxu0 %v607
    %659 = vmatpush.bf16.msra.mxu0 %v603
    %660 = vmatpush.bf16.msra.mxu0 %v599
    %661 = vmatpush.bf16.msra.mxu0 %v595
    %662 = vmatpush.bf16.msra.mxu0 %v591
    %663 = vmatmul.bf16.gmra.mxu0 %v494
    %v664 = vpop.f32.mrf.mxu0
    %v665 = vadd.f32 0.0, %v664
    %v666 = vpop.f32.mrf.mxu0
    %667 = vdwg.mxu0
    %668 = vmatpush.bf16.msra.mxu0 %v620
    %669 = vmatpush.bf16.msra.mxu0 %v616
    %670 = vmatpush.bf16.msra.mxu0 %v612
    %671 = vmatpush.bf16.msra.mxu0 %v608
    %672 = vmatpush.bf16.msra.mxu0 %v604
    %673 = vmatpush.bf16.msra.mxu0 %v600
    %674 = vmatpush.bf16.msra.mxu0 %v596
    %675 = vmatpush.bf16.msra.mxu0 %v592
    %676 = vmatmul.bf16.gmra.mxu0 %v494
    %v677 = vpop.f32.mrf.mxu0
    %v678 = vadd.f32 0.0, %v677
    %v679 = vpop.f32.mrf.mxu0
    %680 = vdwg.mxu0
    %681 = vmatpush.bf16.msra.mxu0 %v621
    %682 = vmatpush.bf16.msra.mxu0 %v617
    %683 = vmatpush.bf16.msra.mxu0 %v613
    %684 = vmatpush.bf16.msra.mxu0 %v609
    %685 = vmatpush.bf16.msra.mxu0 %v605
    %686 = vmatpush.bf16.msra.mxu0 %v601
    %687 = vmatpush.bf16.msra.mxu0 %v597
    %688 = vmatpush.bf16.msra.mxu0 %v593
    %689 = vmatmul.bf16.gmra.mxu0 %v494
    %v690 = vpop.f32.mrf.mxu0
    %v691 = vadd.f32 0.0, %v690
    %v692 = vpop.f32.mrf.mxu0
    %693 = vdwg.mxu0
    %694 = vmatpush.bf16.msra.mxu0 %v622
    %695 = vmatpush.bf16.msra.mxu0 %v618
    %696 = vmatpush.bf16.msra.mxu0 %v614
    %697 = vmatpush.bf16.msra.mxu0 %v610
    %698 = vmatpush.bf16.msra.mxu0 %v606
    %699 = vmatpush.bf16.msra.mxu0 %v602
    %700 = vmatpush.bf16.msra.mxu0 %v598
    %701 = vmatpush.bf16.msra.mxu0 %v594
    %702 = vmatmul.bf16.gmra.mxu0 %v494
    %v703 = vpop.f32.mrf.mxu0
    %v704 = vadd.f32 0.0, %v703
    %v705 = vpop.f32.mrf.mxu0
    %706 = vdwg.mxu0
    %v707 = vadd.f32 %v490, %v665
    %v708 = vadd.f32 %v491, %v678
    %v709 = vadd.f32 %v492, %v691
    %v710 = vadd.f32 %v493, %v704
    %v711 = vxor.u32 %v707, 2147483648
    %v712 = vmul.f32 %v711, 1.442695
    %v713 = vpow.pop %v712
    %v714 = vadd.f32 %v713, 1.0
    %v715 = vrcp.pop %v714
    %v716 = vmul.f32 %v714, %v715
    %v717 = vsub.f32 1.0, %v716
    %v718 = vmul.f32 %v715, %v717
    %v719 = vadd.f32 %v715, %v718
    %vm720 = vweird.f32 %v714
    %vm721 = vweird.f32 %v715
    %vm722 = vmor %vm720, %vm721
    %v723 = vsel %vm722, %v715, %v719
    %v724 = vand.u32 2147483647, %v714
    %vm725 = vcmp.eq.f32.partialorder %v724, 8.507059e+37
    %v726 = vand.u32 %v714, 2147483648
    %v727 = vor.u32 1.1754944e-38, %v726
    %v728 = vsel %vm725, %v727, %v723
    %v729 = vmul.f32 1.0, %v728
    %v730 = vxor.u32 %v708, 2147483648
    %v731 = vmul.f32 %v730, 1.442695
    %v732 = vpow.pop %v731
    %v733 = vadd.f32 %v732, 1.0
    %v734 = vrcp.pop %v733
    %v735 = vmul.f32 %v733, %v734
    %v736 = vsub.f32 1.0, %v735
    %v737 = vmul.f32 %v734, %v736
    %v738 = vadd.f32 %v734, %v737
    %vm739 = vweird.f32 %v733
    %vm740 = vweird.f32 %v734
    %vm741 = vmor %vm739, %vm740
    %v742 = vsel %vm741, %v734, %v738
    %v743 = vand.u32 2147483647, %v733
    %vm744 = vcmp.eq.f32.partialorder %v743, 8.507059e+37
    %v745 = vand.u32 %v733, 2147483648
    %v746 = vor.u32 1.1754944e-38, %v745
    %v747 = vsel %vm744, %v746, %v742
    %v748 = vmul.f32 1.0, %v747
    %v749 = vtanh.pop %v709
    %v750 = vxor.u32 %v710, 2147483648
    %v751 = vmul.f32 %v750, 1.442695
    %v752 = vpow.pop %v751
    %v753 = vadd.f32 %v752, 1.0
    %v754 = vrcp.pop %v753
    %v755 = vmul.f32 %v753, %v754
    %v756 = vsub.f32 1.0, %v755
    %v757 = vmul.f32 %v754, %v756
    %v758 = vadd.f32 %v754, %v757
    %vm759 = vweird.f32 %v753
    %vm760 = vweird.f32 %v754
    %vm761 = vmor %vm759, %vm760
    %v762 = vsel %vm761, %v754, %v758
    %v763 = vand.u32 2147483647, %v753
    %vm764 = vcmp.eq.f32.partialorder %v763, 8.507059e+37
    %v765 = vand.u32 %v753, 2147483648
    %v766 = vor.u32 1.1754944e-38, %v765
    %v767 = vsel %vm764, %v766, %v762
    %v768 = vmul.f32 1.0, %v767
    %v769 = vld [vmem:[#allocation4] sm:$0xff]
    %v770 = vmul.f32 %v748, %v769
    %v771 = vmul.f32 %v729, %v749
    %v772 = vadd.f32 %v770, %v771
    %v773 = vtanh.pop %v772
    %v774 = vmul.f32 %v768, %v773
    %v775 = vpack.c.bf16 %v774, %v774
    %776 = vst [vmem:[#allocation4] sm:$0xff] %v772
    %777 = vst [vmem:[#allocation3] sm:$0xf] %v775
    %s778 = smul.u32 0, 8
    %v779 = vstv %s778
    %vm780 = vcmp.lt.s32.totalorder %v779, %v489
    %v781 = vsel %vm780, 1, 0
    %782 = vset.pattern.permute.xlu0 0
    %783 = vperm.xlu0 %782, %v781
    %v784 = vpop.permute.xlu0 %783
    %vm785 = vcmp.eq.s32.totalorder %v784, 1
    %vm786 = vmpackc.low %vm785, %vm785
    %v787 = vsel %vm786, %v775, 0
    %788 = vst [vmem:[#allocation11] sm:$0xf] %v787
    %s789 = scalar_lea.vmem [#allocation2], 32
    %v790 = vld [vmem:[%s789] sm:$0xff]
    %v791 = vld [vmem:[%s789 + $0x8] sm:$0xff]
    %v792 = vld [vmem:[%s789 + $0x10] sm:$0xff]
    %v793 = vld [vmem:[%s789 + $0x18] sm:$0xff]
    %v794 = vld [vmem:[#allocation3] sm:$0xf]
    %795 = vmatpush.bf16.msra.mxu0 %v619
    %796 = vmatpush.bf16.msra.mxu0 %v615
    %797 = vmatpush.bf16.msra.mxu0 %v611
    %798 = vmatpush.bf16.msra.mxu0 %v607
    %799 = vmatpush.bf16.msra.mxu0 %v603
    %800 = vmatpush.bf16.msra.mxu0 %v599
    %801 = vmatpush.bf16.msra.mxu0 %v595
    %802 = vmatpush.bf16.msra.mxu0 %v591
    %803 = vmatmul.bf16.gmra.mxu0 %v794
    %v804 = vpop.f32.mrf.mxu0
    %v805 = vadd.f32 0.0, %v804
    %v806 = vpop.f32.mrf.mxu0
    %807 = vdwg.mxu0
    %808 = vmatpush.bf16.msra.mxu0 %v620
    %809 = vmatpush.bf16.msra.mxu0 %v616
    %810 = vmatpush.bf16.msra.mxu0 %v612
    %811 = vmatpush.bf16.msra.mxu0 %v608
    %812 = vmatpush.bf16.msra.mxu0 %v604
    %813 = vmatpush.bf16.msra.mxu0 %v600
    %814 = vmatpush.bf16.msra.mxu0 %v596
    %815 = vmatpush.bf16.msra.mxu0 %v592
    %816 = vmatmul.bf16.gmra.mxu0 %v794
    %v817 = vpop.f32.mrf.mxu0
    %v818 = vadd.f32 0.0, %v817
    %v819 = vpop.f32.mrf.mxu0
    %820 = vdwg.mxu0
    %821 = vmatpush.bf16.msra.mxu0 %v621
    %822 = vmatpush.bf16.msra.mxu0 %v617
    %823 = vmatpush.bf16.msra.mxu0 %v613
    %824 = vmatpush.bf16.msra.mxu0 %v609
    %825 = vmatpush.bf16.msra.mxu0 %v605
    %826 = vmatpush.bf16.msra.mxu0 %v601
    %827 = vmatpush.bf16.msra.mxu0 %v597
    %828 = vmatpush.bf16.msra.mxu0 %v593
    %829 = vmatmul.bf16.gmra.mxu0 %v794
    %v830 = vpop.f32.mrf.mxu0
    %v831 = vadd.f32 0.0, %v830
    %v832 = vpop.f32.mrf.mxu0
    %833 = vdwg.mxu0
    %834 = vmatpush.bf16.msra.mxu0 %v622
    %835 = vmatpush.bf16.msra.mxu0 %v618
    %836 = vmatpush.bf16.msra.mxu0 %v614
    %837 = vmatpush.bf16.msra.mxu0 %v610
    %838 = vmatpush.bf16.msra.mxu0 %v606
    %839 = vmatpush.bf16.msra.mxu0 %v602
    %840 = vmatpush.bf16.msra.mxu0 %v598
    %841 = vmatpush.bf16.msra.mxu0 %v594
    %842 = vmatmul.bf16.gmra.mxu0 %v794
    %v843 = vpop.f32.mrf.mxu0
    %v844 = vadd.f32 0.0, %v843
    %v845 = vpop.f32.mrf.mxu0
    %846 = vdwg.mxu0
    %v847 = vadd.f32 %v790, %v805
    %v848 = vadd.f32 %v791, %v818
    %v849 = vadd.f32 %v792, %v831
    %v850 = vadd.f32 %v793, %v844
    %v851 = vxor.u32 %v847, 2147483648
    %v852 = vmul.f32 %v851, 1.442695
    %v853 = vpow.pop %v852
    %v854 = vadd.f32 %v853, 1.0
    %v855 = vrcp.pop %v854
    %v856 = vmul.f32 %v854, %v855
    %v857 = vsub.f32 1.0, %v856
    %v858 = vmul.f32 %v855, %v857
    %v859 = vadd.f32 %v855, %v858
    %vm860 = vweird.f32 %v854
    %vm861 = vweird.f32 %v855
    %vm862 = vmor %vm860, %vm861
    %v863 = vsel %vm862, %v855, %v859
    %v864 = vand.u32 2147483647, %v854
    %vm865 = vcmp.eq.f32.partialorder %v864, 8.507059e+37
    %v866 = vand.u32 %v854, 2147483648
    %v867 = vor.u32 1.1754944e-38, %v866
    %v868 = vsel %vm865, %v867, %v863
    %v869 = vmul.f32 1.0, %v868
    %v870 = vxor.u32 %v848, 2147483648
    %v871 = vmul.f32 %v870, 1.442695
    %v872 = vpow.pop %v871
    %v873 = vadd.f32 %v872, 1.0
    %v874 = vrcp.pop %v873
    %v875 = vmul.f32 %v873, %v874
    %v876 = vsub.f32 1.0, %v875
    %v877 = vmul.f32 %v874, %v876
    %v878 = vadd.f32 %v874, %v877
    %vm879 = vweird.f32 %v873
    %vm880 = vweird.f32 %v874
    %vm881 = vmor %vm879, %vm880
    %v882 = vsel %vm881, %v874, %v878
    %v883 = vand.u32 2147483647, %v873
    %vm884 = vcmp.eq.f32.partialorder %v883, 8.507059e+37
    %v885 = vand.u32 %v873, 2147483648
    %v886 = vor.u32 1.1754944e-38, %v885
    %v887 = vsel %vm884, %v886, %v882
    %v888 = vmul.f32 1.0, %v887
    %v889 = vtanh.pop %v849
    %v890 = vxor.u32 %v850, 2147483648
    %v891 = vmul.f32 %v890, 1.442695
    %v892 = vpow.pop %v891
    %v893 = vadd.f32 %v892, 1.0
    %v894 = vrcp.pop %v893
    %v895 = vmul.f32 %v893, %v894
    %v896 = vsub.f32 1.0, %v895
    %v897 = vmul.f32 %v894, %v896
    %v898 = vadd.f32 %v894, %v897
    %vm899 = vweird.f32 %v893
    %vm900 = vweird.f32 %v894
    %vm901 = vmor %vm899, %vm900
    %v902 = vsel %vm901, %v894, %v898
    %v903 = vand.u32 2147483647, %v893
    %vm904 = vcmp.eq.f32.partialorder %v903, 8.507059e+37
    %v905 = vand.u32 %v893, 2147483648
    %v906 = vor.u32 1.1754944e-38, %v905
    %v907 = vsel %vm904, %v906, %v902
    %v908 = vmul.f32 1.0, %v907
    %v909 = vld [vmem:[#allocation4] sm:$0xff]
    %v910 = vmul.f32 %v888, %v909
    %v911 = vmul.f32 %v869, %v889
    %v912 = vadd.f32 %v910, %v911
    %v913 = vtanh.pop %v912
    %v914 = vmul.f32 %v908, %v913
    %v915 = vpack.c.bf16 %v914, %v914
    %916 = vst [vmem:[#allocation4] sm:$0xff] %v912
    %917 = vst [vmem:[#allocation3] sm:$0xf] %v915
    %s918 = sadd.s32 %s778, 1
    %v919 = vstv %s918
    %vm920 = vcmp.lt.s32.totalorder %v919, %v489
    %v921 = vsel %vm920, 1, 0
    %922 = vset.pattern.permute.xlu0 0
    %923 = vperm.xlu0 %922, %v921
    %v924 = vpop.permute.xlu0 %923
    %vm925 = vcmp.eq.s32.totalorder %v924, 1
    %vm926 = vmpackc.low %vm925, %vm925
    %v927 = vsel %vm926, %v915, 0
    %s928 = scalar_lea.vmem [#allocation11], 4
    %929 = vst [vmem:[%s928] sm:$0xf] %v927
    %s930 = scalar_lea.vmem [#allocation2], 64
    %v931 = vld [vmem:[%s930] sm:$0xff]
    %v932 = vld [vmem:[%s930 + $0x8] sm:$0xff]
    %v933 = vld [vmem:[%s930 + $0x10] sm:$0xff]
    %v934 = vld [vmem:[%s930 + $0x18] sm:$0xff]
    %v935 = vld [vmem:[#allocation3] sm:$0xf]
    %936 = vmatpush.bf16.msra.mxu0 %v619
    %937 = vmatpush.bf16.msra.mxu0 %v615
    %938 = vmatpush.bf16.msra.mxu0 %v611
    %939 = vmatpush.bf16.msra.mxu0 %v607
    %940 = vmatpush.bf16.msra.mxu0 %v603
    %941 = vmatpush.bf16.msra.mxu0 %v599
    %942 = vmatpush.bf16.msra.mxu0 %v595
    %943 = vmatpush.bf16.msra.mxu0 %v591
    %944 = vmatmul.bf16.gmra.mxu0 %v935
    %v945 = vpop.f32.mrf.mxu0
    %v946 = vadd.f32 0.0, %v945
    %v947 = vpop.f32.mrf.mxu0
    %948 = vdwg.mxu0
    %949 = vmatpush.bf16.msra.mxu0 %v620
    %950 = vmatpush.bf16.msra.mxu0 %v616
    %951 = vmatpush.bf16.msra.mxu0 %v612
    %952 = vmatpush.bf16.msra.mxu0 %v608
    %953 = vmatpush.bf16.msra.mxu0 %v604
    %954 = vmatpush.bf16.msra.mxu0 %v600
    %955 = vmatpush.bf16.msra.mxu0 %v596
    %956 = vmatpush.bf16.msra.mxu0 %v592
    %957 = vmatmul.bf16.gmra.mxu0 %v935
    %v958 = vpop.f32.mrf.mxu0
    %v959 = vadd.f32 0.0, %v958
    %v960 = vpop.f32.mrf.mxu0
    %961 = vdwg.mxu0
    %962 = vmatpush.bf16.msra.mxu0 %v621
    %963 = vmatpush.bf16.msra.mxu0 %v617
    %964 = vmatpush.bf16.msra.mxu0 %v613
    %965 = vmatpush.bf16.msra.mxu0 %v609
    %966 = vmatpush.bf16.msra.mxu0 %v605
    %967 = vmatpush.bf16.msra.mxu0 %v601
    %968 = vmatpush.bf16.msra.mxu0 %v597
    %969 = vmatpush.bf16.msra.mxu0 %v593
    %970 = vmatmul.bf16.gmra.mxu0 %v935
    %v971 = vpop.f32.mrf.mxu0
    %v972 = vadd.f32 0.0, %v971
    %v973 = vpop.f32.mrf.mxu0
    %974 = vdwg.mxu0
    %975 = vmatpush.bf16.msra.mxu0 %v622
    %976 = vmatpush.bf16.msra.mxu0 %v618
    %977 = vmatpush.bf16.msra.mxu0 %v614
    %978 = vmatpush.bf16.msra.mxu0 %v610
    %979 = vmatpush.bf16.msra.mxu0 %v606
    %980 = vmatpush.bf16.msra.mxu0 %v602
    %981 = vmatpush.bf16.msra.mxu0 %v598
    %982 = vmatpush.bf16.msra.mxu0 %v594
    %983 = vmatmul.bf16.gmra.mxu0 %v935
    %v984 = vpop.f32.mrf.mxu0
    %v985 = vadd.f32 0.0, %v984
    %v986 = vpop.f32.mrf.mxu0
    %987 = vdwg.mxu0
    %v988 = vadd.f32 %v931, %v946
    %v989 = vadd.f32 %v932, %v959
    %v990 = vadd.f32 %v933, %v972
    %v991 = vadd.f32 %v934, %v985
    %v992 = vxor.u32 %v988, 2147483648
    %v993 = vmul.f32 %v992, 1.442695
    %v994 = vpow.pop %v993
    %v995 = vadd.f32 %v994, 1.0
    %v996 = vrcp.pop %v995
    %v997 = vmul.f32 %v995, %v996
    %v998 = vsub.f32 1.0, %v997
    %v999 = vmul.f32 %v996, %v998
    %v1000 = vadd.f32 %v996, %v999
    %vm1001 = vweird.f32 %v995
    %vm1002 = vweird.f32 %v996
    %vm1003 = vmor %vm1001, %vm1002
    %v1004 = vsel %vm1003, %v996, %v1000
    %v1005 = vand.u32 2147483647, %v995
    %vm1006 = vcmp.eq.f32.partialorder %v1005, 8.507059e+37
    %v1007 = vand.u32 %v995, 2147483648
    %v1008 = vor.u32 1.1754944e-38, %v1007
    %v1009 = vsel %vm1006, %v1008, %v1004
    %v1010 = vmul.f32 1.0, %v1009
    %v1011 = vxor.u32 %v989, 2147483648
    %v1012 = vmul.f32 %v1011, 1.442695
    %v1013 = vpow.pop %v1012
    %v1014 = vadd.f32 %v1013, 1.0
    %v1015 = vrcp.pop %v1014
    %v1016 = vmul.f32 %v1014, %v1015
    %v1017 = vsub.f32 1.0, %v1016
    %v1018 = vmul.f32 %v1015, %v1017
    %v1019 = vadd.f32 %v1015, %v1018
    %vm1020 = vweird.f32 %v1014
    %vm1021 = vweird.f32 %v1015
    %vm1022 = vmor %vm1020, %vm1021
    %v1023 = vsel %vm1022, %v1015, %v1019
    %v1024 = vand.u32 2147483647, %v1014
    %vm1025 = vcmp.eq.f32.partialorder %v1024, 8.507059e+37
    %v1026 = vand.u32 %v1014, 2147483648
    %v1027 = vor.u32 1.1754944e-38, %v1026
    %v1028 = vsel %vm1025, %v1027, %v1023
    %v1029 = vmul.f32 1.0, %v1028
    %v1030 = vtanh.pop %v990
    %v1031 = vxor.u32 %v991, 2147483648
    %v1032 = vmul.f32 %v1031, 1.442695
    %v1033 = vpow.pop %v1032
    %v1034 = vadd.f32 %v1033, 1.0
    %v1035 = vrcp.pop %v1034
    %v1036 = vmul.f32 %v1034, %v1035
    %v1037 = vsub.f32 1.0, %v1036
    %v1038 = vmul.f32 %v1035, %v1037
    %v1039 = vadd.f32 %v1035, %v1038
    %vm1040 = vweird.f32 %v1034
    %vm1041 = vweird.f32 %v1035
    %vm1042 = vmor %vm1040, %vm1041
    %v1043 = vsel %vm1042, %v1035, %v1039
    %v1044 = vand.u32 2147483647, %v1034
    %vm1045 = vcmp.eq.f32.partialorder %v1044, 8.507059e+37
    %v1046 = vand.u32 %v1034, 2147483648
    %v1047 = vor.u32 1.1754944e-38, %v1046
    %v1048 = vsel %vm1045, %v1047, %v1043
    %v1049 = vmul.f32 1.0, %v1048
    %v1050 = vld [vmem:[#allocation4] sm:$0xff]
    %v1051 = vmul.f32 %v1029, %v1050
    %v1052 = vmul.f32 %v1010, %v1030
    %v1053 = vadd.f32 %v1051, %v1052
    %v1054 = vtanh.pop %v1053
    %v1055 = vmul.f32 %v1049, %v1054
    %v1056 = vpack.c.bf16 %v1055, %v1055
    %1057 = vst [vmem:[#allocation4] sm:$0xff] %v1053
    %1058 = vst [vmem:[#allocation3] sm:$0xf] %v1056
    %s1059 = sadd.s32 %s778, 2
    %v1060 = vstv %s1059
    %vm1061 = vcmp.lt.s32.totalorder %v1060, %v489
    %v1062 = vsel %vm1061, 1, 0
    %1063 = vset.pattern.permute.xlu0 0
    %1064 = vperm.xlu0 %1063, %v1062
    %v1065 = vpop.permute.xlu0 %1064
    %vm1066 = vcmp.eq.s32.totalorder %v1065, 1
    %vm1067 = vmpackc.low %vm1066, %vm1066
    %v1068 = vsel %vm1067, %v1056, 0
    %s1069 = scalar_lea.vmem [#allocation11], 8
    %1070 = vst [vmem:[%s1069] sm:$0xf] %v1068
    %s1071 = scalar_lea.vmem [#allocation2], 96
    %v1072 = vld [vmem:[%s1071] sm:$0xff]
    %v1073 = vld [vmem:[%s1071 + $0x8] sm:$0xff]
    %v1074 = vld [vmem:[%s1071 + $0x10] sm:$0xff]
    %v1075 = vld [vmem:[%s1071 + $0x18] sm:$0xff]
    %v1076 = vld [vmem:[#allocation3] sm:$0xf]
    %1077 = vmatpush.bf16.msra.mxu0 %v619
    %1078 = vmatpush.bf16.msra.mxu0 %v615
    %1079 = vmatpush.bf16.msra.mxu0 %v611
    %1080 = vmatpush.bf16.msra.mxu0 %v607
    %1081 = vmatpush.bf16.msra.mxu0 %v603
    %1082 = vmatpush.bf16.msra.mxu0 %v599
    %1083 = vmatpush.bf16.msra.mxu0 %v595
    %1084 = vmatpush.bf16.msra.mxu0 %v591
    %1085 = vmatmul.bf16.gmra.mxu0 %v1076
    %v1086 = vpop.f32.mrf.mxu0
    %v1087 = vadd.f32 0.0, %v1086
    %v1088 = vpop.f32.mrf.mxu0
    %1089 = vdwg.mxu0
    %1090 = vmatpush.bf16.msra.mxu0 %v620
    %1091 = vmatpush.bf16.msra.mxu0 %v616
    %1092 = vmatpush.bf16.msra.mxu0 %v612
    %1093 = vmatpush.bf16.msra.mxu0 %v608
    %1094 = vmatpush.bf16.msra.mxu0 %v604
    %1095 = vmatpush.bf16.msra.mxu0 %v600
    %1096 = vmatpush.bf16.msra.mxu0 %v596
    %1097 = vmatpush.bf16.msra.mxu0 %v592
    %1098 = vmatmul.bf16.gmra.mxu0 %v1076
    %v1099 = vpop.f32.mrf.mxu0
    %v1100 = vadd.f32 0.0, %v1099
    %v1101 = vpop.f32.mrf.mxu0
    %1102 = vdwg.mxu0
    %1103 = vmatpush.bf16.msra.mxu0 %v621
    %1104 = vmatpush.bf16.msra.mxu0 %v617
    %1105 = vmatpush.bf16.msra.mxu0 %v613
    %1106 = vmatpush.bf16.msra.mxu0 %v609
    %1107 = vmatpush.bf16.msra.mxu0 %v605
    %1108 = vmatpush.bf16.msra.mxu0 %v601
    %1109 = vmatpush.bf16.msra.mxu0 %v597
    %1110 = vmatpush.bf16.msra.mxu0 %v593
    %1111 = vmatmul.bf16.gmra.mxu0 %v1076
    %v1112 = vpop.f32.mrf.mxu0
    %v1113 = vadd.f32 0.0, %v1112
    %v1114 = vpop.f32.mrf.mxu0
    %1115 = vdwg.mxu0
    %1116 = vmatpush.bf16.msra.mxu0 %v622
    %1117 = vmatpush.bf16.msra.mxu0 %v618
    %1118 = vmatpush.bf16.msra.mxu0 %v614
    %1119 = vmatpush.bf16.msra.mxu0 %v610
    %1120 = vmatpush.bf16.msra.mxu0 %v606
    %1121 = vmatpush.bf16.msra.mxu0 %v602
    %1122 = vmatpush.bf16.msra.mxu0 %v598
    %1123 = vmatpush.bf16.msra.mxu0 %v594
    %1124 = vmatmul.bf16.gmra.mxu0 %v1076
    %v1125 = vpop.f32.mrf.mxu0
    %v1126 = vadd.f32 0.0, %v1125
    %v1127 = vpop.f32.mrf.mxu0
    %1128 = vdwg.mxu0
    %v1129 = vadd.f32 %v1072, %v1087
    %v1130 = vadd.f32 %v1073, %v1100
    %v1131 = vadd.f32 %v1074, %v1113
    %v1132 = vadd.f32 %v1075, %v1126
    %v1133 = vxor.u32 %v1129, 2147483648
    %v1134 = vmul.f32 %v1133, 1.442695
    %v1135 = vpow.pop %v1134
    %v1136 = vadd.f32 %v1135, 1.0
    %v1137 = vrcp.pop %v1136
    %v1138 = vmul.f32 %v1136, %v1137
    %v1139 = vsub.f32 1.0, %v1138
    %v1140 = vmul.f32 %v1137, %v1139
    %v1141 = vadd.f32 %v1137, %v1140
    %vm1142 = vweird.f32 %v1136
    %vm1143 = vweird.f32 %v1137
    %vm1144 = vmor %vm1142, %vm1143
    %v1145 = vsel %vm1144, %v1137, %v1141
    %v1146 = vand.u32 2147483647, %v1136
    %vm1147 = vcmp.eq.f32.partialorder %v1146, 8.507059e+37
    %v1148 = vand.u32 %v1136, 2147483648
    %v1149 = vor.u32 1.1754944e-38, %v1148
    %v1150 = vsel %vm1147, %v1149, %v1145
    %v1151 = vmul.f32 1.0, %v1150
    %v1152 = vxor.u32 %v1130, 2147483648
    %v1153 = vmul.f32 %v1152, 1.442695
    %v1154 = vpow.pop %v1153
    %v1155 = vadd.f32 %v1154, 1.0
    %v1156 = vrcp.pop %v1155
    %v1157 = vmul.f32 %v1155, %v1156
    %v1158 = vsub.f32 1.0, %v1157
    %v1159 = vmul.f32 %v1156, %v1158
    %v1160 = vadd.f32 %v1156, %v1159
    %vm1161 = vweird.f32 %v1155
    %vm1162 = vweird.f32 %v1156
    %vm1163 = vmor %vm1161, %vm1162
    %v1164 = vsel %vm1163, %v1156, %v1160
    %v1165 = vand.u32 2147483647, %v1155
    %vm1166 = vcmp.eq.f32.partialorder %v1165, 8.507059e+37
    %v1167 = vand.u32 %v1155, 2147483648
    %v1168 = vor.u32 1.1754944e-38, %v1167
    %v1169 = vsel %vm1166, %v1168, %v1164
    %v1170 = vmul.f32 1.0, %v1169
    %v1171 = vtanh.pop %v1131
    %v1172 = vxor.u32 %v1132, 2147483648
    %v1173 = vmul.f32 %v1172, 1.442695
    %v1174 = vpow.pop %v1173
    %v1175 = vadd.f32 %v1174, 1.0
    %v1176 = vrcp.pop %v1175
    %v1177 = vmul.f32 %v1175, %v1176
    %v1178 = vsub.f32 1.0, %v1177
    %v1179 = vmul.f32 %v1176, %v1178
    %v1180 = vadd.f32 %v1176, %v1179
    %vm1181 = vweird.f32 %v1175
    %vm1182 = vweird.f32 %v1176
    %vm1183 = vmor %vm1181, %vm1182
    %v1184 = vsel %vm1183, %v1176, %v1180
    %v1185 = vand.u32 2147483647, %v1175
    %vm1186 = vcmp.eq.f32.partialorder %v1185, 8.507059e+37
    %v1187 = vand.u32 %v1175, 2147483648
    %v1188 = vor.u32 1.1754944e-38, %v1187
    %v1189 = vsel %vm1186, %v1188, %v1184
    %v1190 = vmul.f32 1.0, %v1189
    %v1191 = vld [vmem:[#allocation4] sm:$0xff]
    %v1192 = vmul.f32 %v1170, %v1191
    %v1193 = vmul.f32 %v1151, %v1171
    %v1194 = vadd.f32 %v1192, %v1193
    %v1195 = vtanh.pop %v1194
    %v1196 = vmul.f32 %v1190, %v1195
    %v1197 = vpack.c.bf16 %v1196, %v1196
    %1198 = vst [vmem:[#allocation4] sm:$0xff] %v1194
    %1199 = vst [vmem:[#allocation3] sm:$0xf] %v1197
    %s1200 = sadd.s32 %s778, 3
    %v1201 = vstv %s1200
    %vm1202 = vcmp.lt.s32.totalorder %v1201, %v489
    %v1203 = vsel %vm1202, 1, 0
    %1204 = vset.pattern.permute.xlu0 0
    %1205 = vperm.xlu0 %1204, %v1203
    %v1206 = vpop.permute.xlu0 %1205
    %vm1207 = vcmp.eq.s32.totalorder %v1206, 1
    %vm1208 = vmpackc.low %vm1207, %vm1207
    %v1209 = vsel %vm1208, %v1197, 0
    %s1210 = scalar_lea.vmem [#allocation11], 12
    %1211 = vst [vmem:[%s1210] sm:$0xf] %v1209
    %s1212 = scalar_lea.vmem [#allocation2], 128
    %v1213 = vld [vmem:[%s1212] sm:$0xff]
    %v1214 = vld [vmem:[%s1212 + $0x8] sm:$0xff]
    %v1215 = vld [vmem:[%s1212 + $0x10] sm:$0xff]
    %v1216 = vld [vmem:[%s1212 + $0x18] sm:$0xff]
    %v1217 = vld [vmem:[#allocation3] sm:$0xf]
    %1218 = vmatpush.bf16.msra.mxu0 %v619
    %1219 = vmatpush.bf16.msra.mxu0 %v615
    %1220 = vmatpush.bf16.msra.mxu0 %v611
    %1221 = vmatpush.bf16.msra.mxu0 %v607
    %1222 = vmatpush.bf16.msra.mxu0 %v603
    %1223 = vmatpush.bf16.msra.mxu0 %v599
    %1224 = vmatpush.bf16.msra.mxu0 %v595
    %1225 = vmatpush.bf16.msra.mxu0 %v591
    %1226 = vmatmul.bf16.gmra.mxu0 %v1217
    %v1227 = vpop.f32.mrf.mxu0
    %v1228 = vadd.f32 0.0, %v1227
    %v1229 = vpop.f32.mrf.mxu0
    %1230 = vdwg.mxu0
    %1231 = vmatpush.bf16.msra.mxu0 %v620
    %1232 = vmatpush.bf16.msra.mxu0 %v616
    %1233 = vmatpush.bf16.msra.mxu0 %v612
    %1234 = vmatpush.bf16.msra.mxu0 %v608
    %1235 = vmatpush.bf16.msra.mxu0 %v604
    %1236 = vmatpush.bf16.msra.mxu0 %v600
    %1237 = vmatpush.bf16.msra.mxu0 %v596
    %1238 = vmatpush.bf16.msra.mxu0 %v592
    %1239 = vmatmul.bf16.gmra.mxu0 %v1217
    %v1240 = vpop.f32.mrf.mxu0
    %v1241 = vadd.f32 0.0, %v1240
    %v1242 = vpop.f32.mrf.mxu0
    %1243 = vdwg.mxu0
    %1244 = vmatpush.bf16.msra.mxu0 %v621
    %1245 = vmatpush.bf16.msra.mxu0 %v617
    %1246 = vmatpush.bf16.msra.mxu0 %v613
    %1247 = vmatpush.bf16.msra.mxu0 %v609
    %1248 = vmatpush.bf16.msra.mxu0 %v605
    %1249 = vmatpush.bf16.msra.mxu0 %v601
    %1250 = vmatpush.bf16.msra.mxu0 %v597
    %1251 = vmatpush.bf16.msra.mxu0 %v593
    %1252 = vmatmul.bf16.gmra.mxu0 %v1217
    %v1253 = vpop.f32.mrf.mxu0
    %v1254 = vadd.f32 0.0, %v1253
    %v1255 = vpop.f32.mrf.mxu0
    %1256 = vdwg.mxu0
    %1257 = vmatpush.bf16.msra.mxu0 %v622
    %1258 = vmatpush.bf16.msra.mxu0 %v618
    %1259 = vmatpush.bf16.msra.mxu0 %v614
    %1260 = vmatpush.bf16.msra.mxu0 %v610
    %1261 = vmatpush.bf16.msra.mxu0 %v606
    %1262 = vmatpush.bf16.msra.mxu0 %v602
    %1263 = vmatpush.bf16.msra.mxu0 %v598
    %1264 = vmatpush.bf16.msra.mxu0 %v594
    %1265 = vmatmul.bf16.gmra.mxu0 %v1217
    %v1266 = vpop.f32.mrf.mxu0
    %v1267 = vadd.f32 0.0, %v1266
    %v1268 = vpop.f32.mrf.mxu0
    %1269 = vdwg.mxu0
    %v1270 = vadd.f32 %v1213, %v1228
    %v1271 = vadd.f32 %v1214, %v1241
    %v1272 = vadd.f32 %v1215, %v1254
    %v1273 = vadd.f32 %v1216, %v1267
    %v1274 = vxor.u32 %v1270, 2147483648
    %v1275 = vmul.f32 %v1274, 1.442695
    %v1276 = vpow.pop %v1275
    %v1277 = vadd.f32 %v1276, 1.0
    %v1278 = vrcp.pop %v1277
    %v1279 = vmul.f32 %v1277, %v1278
    %v1280 = vsub.f32 1.0, %v1279
    %v1281 = vmul.f32 %v1278, %v1280
    %v1282 = vadd.f32 %v1278, %v1281
    %vm1283 = vweird.f32 %v1277
    %vm1284 = vweird.f32 %v1278
    %vm1285 = vmor %vm1283, %vm1284
    %v1286 = vsel %vm1285, %v1278, %v1282
    %v1287 = vand.u32 2147483647, %v1277
    %vm1288 = vcmp.eq.f32.partialorder %v1287, 8.507059e+37
    %v1289 = vand.u32 %v1277, 2147483648
    %v1290 = vor.u32 1.1754944e-38, %v1289
    %v1291 = vsel %vm1288, %v1290, %v1286
    %v1292 = vmul.f32 1.0, %v1291
    %v1293 = vxor.u32 %v1271, 2147483648
    %v1294 = vmul.f32 %v1293, 1.442695
    %v1295 = vpow.pop %v1294
    %v1296 = vadd.f32 %v1295, 1.0
    %v1297 = vrcp.pop %v1296
    %v1298 = vmul.f32 %v1296, %v1297
    %v1299 = vsub.f32 1.0, %v1298
    %v1300 = vmul.f32 %v1297, %v1299
    %v1301 = vadd.f32 %v1297, %v1300
    %vm1302 = vweird.f32 %v1296
    %vm1303 = vweird.f32 %v1297
    %vm1304 = vmor %vm1302, %vm1303
    %v1305 = vsel %vm1304, %v1297, %v1301
    %v1306 = vand.u32 2147483647, %v1296
    %vm1307 = vcmp.eq.f32.partialorder %v1306, 8.507059e+37
    %v1308 = vand.u32 %v1296, 2147483648
    %v1309 = vor.u32 1.1754944e-38, %v1308
    %v1310 = vsel %vm1307, %v1309, %v1305
    %v1311 = vmul.f32 1.0, %v1310
    %v1312 = vtanh.pop %v1272
    %v1313 = vxor.u32 %v1273, 2147483648
    %v1314 = vmul.f32 %v1313, 1.442695
    %v1315 = vpow.pop %v1314
    %v1316 = vadd.f32 %v1315, 1.0
    %v1317 = vrcp.pop %v1316
    %v1318 = vmul.f32 %v1316, %v1317
    %v1319 = vsub.f32 1.0, %v1318
    %v1320 = vmul.f32 %v1317, %v1319
    %v1321 = vadd.f32 %v1317, %v1320
    %vm1322 = vweird.f32 %v1316
    %vm1323 = vweird.f32 %v1317
    %vm1324 = vmor %vm1322, %vm1323
    %v1325 = vsel %vm1324, %v1317, %v1321
    %v1326 = vand.u32 2147483647, %v1316
    %vm1327 = vcmp.eq.f32.partialorder %v1326, 8.507059e+37
    %v1328 = vand.u32 %v1316, 2147483648
    %v1329 = vor.u32 1.1754944e-38, %v1328
    %v1330 = vsel %vm1327, %v1329, %v1325
    %v1331 = vmul.f32 1.0, %v1330
    %v1332 = vld [vmem:[#allocation4] sm:$0xff]
    %v1333 = vmul.f32 %v1311, %v1332
    %v1334 = vmul.f32 %v1292, %v1312
    %v1335 = vadd.f32 %v1333, %v1334
    %v1336 = vtanh.pop %v1335
    %v1337 = vmul.f32 %v1331, %v1336
    %v1338 = vpack.c.bf16 %v1337, %v1337
    %1339 = vst [vmem:[#allocation4] sm:$0xff] %v1335
    %1340 = vst [vmem:[#allocation3] sm:$0xf] %v1338
    %s1341 = sadd.s32 %s778, 4
    %v1342 = vstv %s1341
    %vm1343 = vcmp.lt.s32.totalorder %v1342, %v489
    %v1344 = vsel %vm1343, 1, 0
    %1345 = vset.pattern.permute.xlu0 0
    %1346 = vperm.xlu0 %1345, %v1344
    %v1347 = vpop.permute.xlu0 %1346
    %vm1348 = vcmp.eq.s32.totalorder %v1347, 1
    %vm1349 = vmpackc.low %vm1348, %vm1348
    %v1350 = vsel %vm1349, %v1338, 0
    %s1351 = scalar_lea.vmem [#allocation11], 16
    %1352 = vst [vmem:[%s1351] sm:$0xf] %v1350
    %s1353 = scalar_lea.vmem [#allocation2], 160
    %v1354 = vld [vmem:[%s1353] sm:$0xff]
    %v1355 = vld [vmem:[%s1353 + $0x8] sm:$0xff]
    %v1356 = vld [vmem:[%s1353 + $0x10] sm:$0xff]
    %v1357 = vld [vmem:[%s1353 + $0x18] sm:$0xff]
    %v1358 = vld [vmem:[#allocation3] sm:$0xf]
    %1359 = vmatpush.bf16.msra.mxu0 %v619
    %1360 = vmatpush.bf16.msra.mxu0 %v615
    %1361 = vmatpush.bf16.msra.mxu0 %v611
    %1362 = vmatpush.bf16.msra.mxu0 %v607
    %1363 = vmatpush.bf16.msra.mxu0 %v603
    %1364 = vmatpush.bf16.msra.mxu0 %v599
    %1365 = vmatpush.bf16.msra.mxu0 %v595
    %1366 = vmatpush.bf16.msra.mxu0 %v591
    %1367 = vmatmul.bf16.gmra.mxu0 %v1358
    %v1368 = vpop.f32.mrf.mxu0
    %v1369 = vadd.f32 0.0, %v1368
    %v1370 = vpop.f32.mrf.mxu0
    %1371 = vdwg.mxu0
    %1372 = vmatpush.bf16.msra.mxu0 %v620
    %1373 = vmatpush.bf16.msra.mxu0 %v616
    %1374 = vmatpush.bf16.msra.mxu0 %v612
    %1375 = vmatpush.bf16.msra.mxu0 %v608
    %1376 = vmatpush.bf16.msra.mxu0 %v604
    %1377 = vmatpush.bf16.msra.mxu0 %v600
    %1378 = vmatpush.bf16.msra.mxu0 %v596
    %1379 = vmatpush.bf16.msra.mxu0 %v592
    %1380 = vmatmul.bf16.gmra.mxu0 %v1358
    %v1381 = vpop.f32.mrf.mxu0
    %v1382 = vadd.f32 0.0, %v1381
    %v1383 = vpop.f32.mrf.mxu0
    %1384 = vdwg.mxu0
    %1385 = vmatpush.bf16.msra.mxu0 %v621
    %1386 = vmatpush.bf16.msra.mxu0 %v617
    %1387 = vmatpush.bf16.msra.mxu0 %v613
    %1388 = vmatpush.bf16.msra.mxu0 %v609
    %1389 = vmatpush.bf16.msra.mxu0 %v605
    %1390 = vmatpush.bf16.msra.mxu0 %v601
    %1391 = vmatpush.bf16.msra.mxu0 %v597
    %1392 = vmatpush.bf16.msra.mxu0 %v593
    %1393 = vmatmul.bf16.gmra.mxu0 %v1358
    %v1394 = vpop.f32.mrf.mxu0
    %v1395 = vadd.f32 0.0, %v1394
    %v1396 = vpop.f32.mrf.mxu0
    %1397 = vdwg.mxu0
    %1398 = vmatpush.bf16.msra.mxu0 %v622
    %1399 = vmatpush.bf16.msra.mxu0 %v618
    %1400 = vmatpush.bf16.msra.mxu0 %v614
    %1401 = vmatpush.bf16.msra.mxu0 %v610
    %1402 = vmatpush.bf16.msra.mxu0 %v606
    %1403 = vmatpush.bf16.msra.mxu0 %v602
    %1404 = vmatpush.bf16.msra.mxu0 %v598
    %1405 = vmatpush.bf16.msra.mxu0 %v594
    %1406 = vmatmul.bf16.gmra.mxu0 %v1358
    %v1407 = vpop.f32.mrf.mxu0
    %v1408 = vadd.f32 0.0, %v1407
    %v1409 = vpop.f32.mrf.mxu0
    %1410 = vdwg.mxu0
    %v1411 = vadd.f32 %v1354, %v1369
    %v1412 = vadd.f32 %v1355, %v1382
    %v1413 = vadd.f32 %v1356, %v1395
    %v1414 = vadd.f32 %v1357, %v1408
    %v1415 = vxor.u32 %v1411, 2147483648
    %v1416 = vmul.f32 %v1415, 1.442695
    %v1417 = vpow.pop %v1416
    %v1418 = vadd.f32 %v1417, 1.0
    %v1419 = vrcp.pop %v1418
    %v1420 = vmul.f32 %v1418, %v1419
    %v1421 = vsub.f32 1.0, %v1420
    %v1422 = vmul.f32 %v1419, %v1421
    %v1423 = vadd.f32 %v1419, %v1422
    %vm1424 = vweird.f32 %v1418
    %vm1425 = vweird.f32 %v1419
    %vm1426 = vmor %vm1424, %vm1425
    %v1427 = vsel %vm1426, %v1419, %v1423
    %v1428 = vand.u32 2147483647, %v1418
    %vm1429 = vcmp.eq.f32.partialorder %v1428, 8.507059e+37
    %v1430 = vand.u32 %v1418, 2147483648
    %v1431 = vor.u32 1.1754944e-38, %v1430
    %v1432 = vsel %vm1429, %v1431, %v1427
    %v1433 = vmul.f32 1.0, %v1432
    %v1434 = vxor.u32 %v1412, 2147483648
    %v1435 = vmul.f32 %v1434, 1.442695
    %v1436 = vpow.pop %v1435
    %v1437 = vadd.f32 %v1436, 1.0
    %v1438 = vrcp.pop %v1437
    %v1439 = vmul.f32 %v1437, %v1438
    %v1440 = vsub.f32 1.0, %v1439
    %v1441 = vmul.f32 %v1438, %v1440
    %v1442 = vadd.f32 %v1438, %v1441
    %vm1443 = vweird.f32 %v1437
    %vm1444 = vweird.f32 %v1438
    %vm1445 = vmor %vm1443, %vm1444
    %v1446 = vsel %vm1445, %v1438, %v1442
    %v1447 = vand.u32 2147483647, %v1437
    %vm1448 = vcmp.eq.f32.partialorder %v1447, 8.507059e+37
    %v1449 = vand.u32 %v1437, 2147483648
    %v1450 = vor.u32 1.1754944e-38, %v1449
    %v1451 = vsel %vm1448, %v1450, %v1446
    %v1452 = vmul.f32 1.0, %v1451
    %v1453 = vtanh.pop %v1413
    %v1454 = vxor.u32 %v1414, 2147483648
    %v1455 = vmul.f32 %v1454, 1.442695
    %v1456 = vpow.pop %v1455
    %v1457 = vadd.f32 %v1456, 1.0
    %v1458 = vrcp.pop %v1457
    %v1459 = vmul.f32 %v1457, %v1458
    %v1460 = vsub.f32 1.0, %v1459
    %v1461 = vmul.f32 %v1458, %v1460
    %v1462 = vadd.f32 %v1458, %v1461
    %vm1463 = vweird.f32 %v1457
    %vm1464 = vweird.f32 %v1458
    %vm1465 = vmor %vm1463, %vm1464
    %v1466 = vsel %vm1465, %v1458, %v1462
    %v1467 = vand.u32 2147483647, %v1457
    %vm1468 = vcmp.eq.f32.partialorder %v1467, 8.507059e+37
    %v1469 = vand.u32 %v1457, 2147483648
    %v1470 = vor.u32 1.1754944e-38, %v1469
    %v1471 = vsel %vm1468, %v1470, %v1466
    %v1472 = vmul.f32 1.0, %v1471
    %v1473 = vld [vmem:[#allocation4] sm:$0xff]
    %v1474 = vmul.f32 %v1452, %v1473
    %v1475 = vmul.f32 %v1433, %v1453
    %v1476 = vadd.f32 %v1474, %v1475
    %v1477 = vtanh.pop %v1476
    %v1478 = vmul.f32 %v1472, %v1477
    %v1479 = vpack.c.bf16 %v1478, %v1478
    %1480 = vst [vmem:[#allocation4] sm:$0xff] %v1476
    %1481 = vst [vmem:[#allocation3] sm:$0xf] %v1479
    %s1482 = sadd.s32 %s778, 5
    %v1483 = vstv %s1482
    %vm1484 = vcmp.lt.s32.totalorder %v1483, %v489
    %v1485 = vsel %vm1484, 1, 0
    %1486 = vset.pattern.permute.xlu0 0
    %1487 = vperm.xlu0 %1486, %v1485
    %v1488 = vpop.permute.xlu0 %1487
    %vm1489 = vcmp.eq.s32.totalorder %v1488, 1
    %vm1490 = vmpackc.low %vm1489, %vm1489
    %v1491 = vsel %vm1490, %v1479, 0
    %s1492 = scalar_lea.vmem [#allocation11], 20
    %1493 = vst [vmem:[%s1492] sm:$0xf] %v1491
    %s1494 = scalar_lea.vmem [#allocation2], 192
    %v1495 = vld [vmem:[%s1494] sm:$0xff]
    %v1496 = vld [vmem:[%s1494 + $0x8] sm:$0xff]
    %v1497 = vld [vmem:[%s1494 + $0x10] sm:$0xff]
    %v1498 = vld [vmem:[%s1494 + $0x18] sm:$0xff]
    %v1499 = vld [vmem:[#allocation3] sm:$0xf]
    %1500 = vmatpush.bf16.msra.mxu0 %v619
    %1501 = vmatpush.bf16.msra.mxu0 %v615
    %1502 = vmatpush.bf16.msra.mxu0 %v611
    %1503 = vmatpush.bf16.msra.mxu0 %v607
    %1504 = vmatpush.bf16.msra.mxu0 %v603
    %1505 = vmatpush.bf16.msra.mxu0 %v599
    %1506 = vmatpush.bf16.msra.mxu0 %v595
    %1507 = vmatpush.bf16.msra.mxu0 %v591
    %1508 = vmatmul.bf16.gmra.mxu0 %v1499
    %v1509 = vpop.f32.mrf.mxu0
    %v1510 = vadd.f32 0.0, %v1509
    %v1511 = vpop.f32.mrf.mxu0
    %1512 = vdwg.mxu0
    %1513 = vmatpush.bf16.msra.mxu0 %v620
    %1514 = vmatpush.bf16.msra.mxu0 %v616
    %1515 = vmatpush.bf16.msra.mxu0 %v612
    %1516 = vmatpush.bf16.msra.mxu0 %v608
    %1517 = vmatpush.bf16.msra.mxu0 %v604
    %1518 = vmatpush.bf16.msra.mxu0 %v600
    %1519 = vmatpush.bf16.msra.mxu0 %v596
    %1520 = vmatpush.bf16.msra.mxu0 %v592
    %1521 = vmatmul.bf16.gmra.mxu0 %v1499
    %v1522 = vpop.f32.mrf.mxu0
    %v1523 = vadd.f32 0.0, %v1522
    %v1524 = vpop.f32.mrf.mxu0
    %1525 = vdwg.mxu0
    %1526 = vmatpush.bf16.msra.mxu0 %v621
    %1527 = vmatpush.bf16.msra.mxu0 %v617
    %1528 = vmatpush.bf16.msra.mxu0 %v613
    %1529 = vmatpush.bf16.msra.mxu0 %v609
    %1530 = vmatpush.bf16.msra.mxu0 %v605
    %1531 = vmatpush.bf16.msra.mxu0 %v601
    %1532 = vmatpush.bf16.msra.mxu0 %v597
    %1533 = vmatpush.bf16.msra.mxu0 %v593
    %1534 = vmatmul.bf16.gmra.mxu0 %v1499
    %v1535 = vpop.f32.mrf.mxu0
    %v1536 = vadd.f32 0.0, %v1535
    %v1537 = vpop.f32.mrf.mxu0
    %1538 = vdwg.mxu0
    %1539 = vmatpush.bf16.msra.mxu0 %v622
    %1540 = vmatpush.bf16.msra.mxu0 %v618
    %1541 = vmatpush.bf16.msra.mxu0 %v614
    %1542 = vmatpush.bf16.msra.mxu0 %v610
    %1543 = vmatpush.bf16.msra.mxu0 %v606
    %1544 = vmatpush.bf16.msra.mxu0 %v602
    %1545 = vmatpush.bf16.msra.mxu0 %v598
    %1546 = vmatpush.bf16.msra.mxu0 %v594
    %1547 = vmatmul.bf16.gmra.mxu0 %v1499
    %v1548 = vpop.f32.mrf.mxu0
    %v1549 = vadd.f32 0.0, %v1548
    %v1550 = vpop.f32.mrf.mxu0
    %1551 = vdwg.mxu0
    %v1552 = vadd.f32 %v1495, %v1510
    %v1553 = vadd.f32 %v1496, %v1523
    %v1554 = vadd.f32 %v1497, %v1536
    %v1555 = vadd.f32 %v1498, %v1549
    %v1556 = vxor.u32 %v1552, 2147483648
    %v1557 = vmul.f32 %v1556, 1.442695
    %v1558 = vpow.pop %v1557
    %v1559 = vadd.f32 %v1558, 1.0
    %v1560 = vrcp.pop %v1559
    %v1561 = vmul.f32 %v1559, %v1560
    %v1562 = vsub.f32 1.0, %v1561
    %v1563 = vmul.f32 %v1560, %v1562
    %v1564 = vadd.f32 %v1560, %v1563
    %vm1565 = vweird.f32 %v1559
    %vm1566 = vweird.f32 %v1560
    %vm1567 = vmor %vm1565, %vm1566
    %v1568 = vsel %vm1567, %v1560, %v1564
    %v1569 = vand.u32 2147483647, %v1559
    %vm1570 = vcmp.eq.f32.partialorder %v1569, 8.507059e+37
    %v1571 = vand.u32 %v1559, 2147483648
    %v1572 = vor.u32 1.1754944e-38, %v1571
    %v1573 = vsel %vm1570, %v1572, %v1568
    %v1574 = vmul.f32 1.0, %v1573
    %v1575 = vxor.u32 %v1553, 2147483648
    %v1576 = vmul.f32 %v1575, 1.442695
    %v1577 = vpow.pop %v1576
    %v1578 = vadd.f32 %v1577, 1.0
    %v1579 = vrcp.pop %v1578
    %v1580 = vmul.f32 %v1578, %v1579
    %v1581 = vsub.f32 1.0, %v1580
    %v1582 = vmul.f32 %v1579, %v1581
    %v1583 = vadd.f32 %v1579, %v1582
    %vm1584 = vweird.f32 %v1578
    %vm1585 = vweird.f32 %v1579
    %vm1586 = vmor %vm1584, %vm1585
    %v1587 = vsel %vm1586, %v1579, %v1583
    %v1588 = vand.u32 2147483647, %v1578
    %vm1589 = vcmp.eq.f32.partialorder %v1588, 8.507059e+37
    %v1590 = vand.u32 %v1578, 2147483648
    %v1591 = vor.u32 1.1754944e-38, %v1590
    %v1592 = vsel %vm1589, %v1591, %v1587
    %v1593 = vmul.f32 1.0, %v1592
    %v1594 = vtanh.pop %v1554
    %v1595 = vxor.u32 %v1555, 2147483648
    %v1596 = vmul.f32 %v1595, 1.442695
    %v1597 = vpow.pop %v1596
    %v1598 = vadd.f32 %v1597, 1.0
    %v1599 = vrcp.pop %v1598
    %v1600 = vmul.f32 %v1598, %v1599
    %v1601 = vsub.f32 1.0, %v1600
    %v1602 = vmul.f32 %v1599, %v1601
    %v1603 = vadd.f32 %v1599, %v1602
    %vm1604 = vweird.f32 %v1598
    %vm1605 = vweird.f32 %v1599
    %vm1606 = vmor %vm1604, %vm1605
    %v1607 = vsel %vm1606, %v1599, %v1603
    %v1608 = vand.u32 2147483647, %v1598
    %vm1609 = vcmp.eq.f32.partialorder %v1608, 8.507059e+37
    %v1610 = vand.u32 %v1598, 2147483648
    %v1611 = vor.u32 1.1754944e-38, %v1610
    %v1612 = vsel %vm1609, %v1611, %v1607
    %v1613 = vmul.f32 1.0, %v1612
    %v1614 = vld [vmem:[#allocation4] sm:$0xff]
    %v1615 = vmul.f32 %v1593, %v1614
    %v1616 = vmul.f32 %v1574, %v1594
    %v1617 = vadd.f32 %v1615, %v1616
    %v1618 = vtanh.pop %v1617
    %v1619 = vmul.f32 %v1613, %v1618
    %v1620 = vpack.c.bf16 %v1619, %v1619
    %1621 = vst [vmem:[#allocation4] sm:$0xff] %v1617
    %1622 = vst [vmem:[#allocation3] sm:$0xf] %v1620
    %s1623 = sadd.s32 %s778, 6
    %v1624 = vstv %s1623
    %vm1625 = vcmp.lt.s32.totalorder %v1624, %v489
    %v1626 = vsel %vm1625, 1, 0
    %1627 = vset.pattern.permute.xlu0 0
    %1628 = vperm.xlu0 %1627, %v1626
    %v1629 = vpop.permute.xlu0 %1628
    %vm1630 = vcmp.eq.s32.totalorder %v1629, 1
    %vm1631 = vmpackc.low %vm1630, %vm1630
    %v1632 = vsel %vm1631, %v1620, 0
    %s1633 = scalar_lea.vmem [#allocation11], 24
    %1634 = vst [vmem:[%s1633] sm:$0xf] %v1632
    %s1635 = scalar_lea.vmem [#allocation2], 224
    %v1636 = vld [vmem:[%s1635] sm:$0xff]
    %v1637 = vld [vmem:[%s1635 + $0x8] sm:$0xff]
    %v1638 = vld [vmem:[%s1635 + $0x10] sm:$0xff]
    %v1639 = vld [vmem:[%s1635 + $0x18] sm:$0xff]
    %v1640 = vld [vmem:[#allocation3] sm:$0xf]
    %1641 = vmatpush.bf16.msra.mxu0 %v619
    %1642 = vmatpush.bf16.msra.mxu0 %v615
    %1643 = vmatpush.bf16.msra.mxu0 %v611
    %1644 = vmatpush.bf16.msra.mxu0 %v607
    %1645 = vmatpush.bf16.msra.mxu0 %v603
    %1646 = vmatpush.bf16.msra.mxu0 %v599
    %1647 = vmatpush.bf16.msra.mxu0 %v595
    %1648 = vmatpush.bf16.msra.mxu0 %v591
    %1649 = vmatmul.bf16.gmra.mxu0 %v1640
    %v1650 = vpop.f32.mrf.mxu0
    %v1651 = vadd.f32 0.0, %v1650
    %v1652 = vpop.f32.mrf.mxu0
    %1653 = vdwg.mxu0
    %1654 = vmatpush.bf16.msra.mxu0 %v620
    %1655 = vmatpush.bf16.msra.mxu0 %v616
    %1656 = vmatpush.bf16.msra.mxu0 %v612
    %1657 = vmatpush.bf16.msra.mxu0 %v608
    %1658 = vmatpush.bf16.msra.mxu0 %v604
    %1659 = vmatpush.bf16.msra.mxu0 %v600
    %1660 = vmatpush.bf16.msra.mxu0 %v596
    %1661 = vmatpush.bf16.msra.mxu0 %v592
    %1662 = vmatmul.bf16.gmra.mxu0 %v1640
    %v1663 = vpop.f32.mrf.mxu0
    %v1664 = vadd.f32 0.0, %v1663
    %v1665 = vpop.f32.mrf.mxu0
    %1666 = vdwg.mxu0
    %1667 = vmatpush.bf16.msra.mxu0 %v621
    %1668 = vmatpush.bf16.msra.mxu0 %v617
    %1669 = vmatpush.bf16.msra.mxu0 %v613
    %1670 = vmatpush.bf16.msra.mxu0 %v609
    %1671 = vmatpush.bf16.msra.mxu0 %v605
    %1672 = vmatpush.bf16.msra.mxu0 %v601
    %1673 = vmatpush.bf16.msra.mxu0 %v597
    %1674 = vmatpush.bf16.msra.mxu0 %v593
    %1675 = vmatmul.bf16.gmra.mxu0 %v1640
    %v1676 = vpop.f32.mrf.mxu0
    %v1677 = vadd.f32 0.0, %v1676
    %v1678 = vpop.f32.mrf.mxu0
    %1679 = vdwg.mxu0
    %1680 = vmatpush.bf16.msra.mxu0 %v622
    %1681 = vmatpush.bf16.msra.mxu0 %v618
    %1682 = vmatpush.bf16.msra.mxu0 %v614
    %1683 = vmatpush.bf16.msra.mxu0 %v610
    %1684 = vmatpush.bf16.msra.mxu0 %v606
    %1685 = vmatpush.bf16.msra.mxu0 %v602
    %1686 = vmatpush.bf16.msra.mxu0 %v598
    %1687 = vmatpush.bf16.msra.mxu0 %v594
    %1688 = vmatmul.bf16.gmra.mxu0 %v1640
    %v1689 = vpop.f32.mrf.mxu0
    %v1690 = vadd.f32 0.0, %v1689
    %v1691 = vpop.f32.mrf.mxu0
    %1692 = vdwg.mxu0
    %v1693 = vadd.f32 %v1636, %v1651
    %v1694 = vadd.f32 %v1637, %v1664
    %v1695 = vadd.f32 %v1638, %v1677
    %v1696 = vadd.f32 %v1639, %v1690
    %v1697 = vxor.u32 %v1693, 2147483648
    %v1698 = vmul.f32 %v1697, 1.442695
    %v1699 = vpow.pop %v1698
    %v1700 = vadd.f32 %v1699, 1.0
    %v1701 = vrcp.pop %v1700
    %v1702 = vmul.f32 %v1700, %v1701
    %v1703 = vsub.f32 1.0, %v1702
    %v1704 = vmul.f32 %v1701, %v1703
    %v1705 = vadd.f32 %v1701, %v1704
    %vm1706 = vweird.f32 %v1700
    %vm1707 = vweird.f32 %v1701
    %vm1708 = vmor %vm1706, %vm1707
    %v1709 = vsel %vm1708, %v1701, %v1705
    %v1710 = vand.u32 2147483647, %v1700
    %vm1711 = vcmp.eq.f32.partialorder %v1710, 8.507059e+37
    %v1712 = vand.u32 %v1700, 2147483648
    %v1713 = vor.u32 1.1754944e-38, %v1712
    %v1714 = vsel %vm1711, %v1713, %v1709
    %v1715 = vmul.f32 1.0, %v1714
    %v1716 = vxor.u32 %v1694, 2147483648
    %v1717 = vmul.f32 %v1716, 1.442695
    %v1718 = vpow.pop %v1717
    %v1719 = vadd.f32 %v1718, 1.0
    %v1720 = vrcp.pop %v1719
    %v1721 = vmul.f32 %v1719, %v1720
    %v1722 = vsub.f32 1.0, %v1721
    %v1723 = vmul.f32 %v1720, %v1722
    %v1724 = vadd.f32 %v1720, %v1723
    %vm1725 = vweird.f32 %v1719
    %vm1726 = vweird.f32 %v1720
    %vm1727 = vmor %vm1725, %vm1726
    %v1728 = vsel %vm1727, %v1720, %v1724
    %v1729 = vand.u32 2147483647, %v1719
    %vm1730 = vcmp.eq.f32.partialorder %v1729, 8.507059e+37
    %v1731 = vand.u32 %v1719, 2147483648
    %v1732 = vor.u32 1.1754944e-38, %v1731
    %v1733 = vsel %vm1730, %v1732, %v1728
    %v1734 = vmul.f32 1.0, %v1733
    %v1735 = vtanh.pop %v1695
    %v1736 = vxor.u32 %v1696, 2147483648
    %v1737 = vmul.f32 %v1736, 1.442695
    %v1738 = vpow.pop %v1737
    %v1739 = vadd.f32 %v1738, 1.0
    %v1740 = vrcp.pop %v1739
    %v1741 = vmul.f32 %v1739, %v1740
    %v1742 = vsub.f32 1.0, %v1741
    %v1743 = vmul.f32 %v1740, %v1742
    %v1744 = vadd.f32 %v1740, %v1743
    %vm1745 = vweird.f32 %v1739
    %vm1746 = vweird.f32 %v1740
    %vm1747 = vmor %vm1745, %vm1746
    %v1748 = vsel %vm1747, %v1740, %v1744
    %v1749 = vand.u32 2147483647, %v1739
    %vm1750 = vcmp.eq.f32.partialorder %v1749, 8.507059e+37
    %v1751 = vand.u32 %v1739, 2147483648
    %v1752 = vor.u32 1.1754944e-38, %v1751
    %v1753 = vsel %vm1750, %v1752, %v1748
    %v1754 = vmul.f32 1.0, %v1753
    %v1755 = vld [vmem:[#allocation4] sm:$0xff]
    %v1756 = vmul.f32 %v1734, %v1755
    %v1757 = vmul.f32 %v1715, %v1735
    %v1758 = vadd.f32 %v1756, %v1757
    %v1759 = vtanh.pop %v1758
    %v1760 = vmul.f32 %v1754, %v1759
    %v1761 = vpack.c.bf16 %v1760, %v1760
    %1762 = vst [vmem:[#allocation4] sm:$0xff] %v1758
    %1763 = vst [vmem:[#allocation3] sm:$0xf] %v1761
    %s1764 = sadd.s32 %s778, 7
    %v1765 = vstv %s1764
    %vm1766 = vcmp.lt.s32.totalorder %v1765, %v489
    %v1767 = vsel %vm1766, 1, 0
    %1768 = vset.pattern.permute.xlu0 0
    %1769 = vperm.xlu0 %1768, %v1767
    %v1770 = vpop.permute.xlu0 %1769
    %vm1771 = vcmp.eq.s32.totalorder %v1770, 1
    %vm1772 = vmpackc.low %vm1771, %vm1771
    %v1773 = vsel %vm1772, %v1761, 0
    %s1774 = scalar_lea.vmem [#allocation11], 28
    %1775 = vst [vmem:[%s1774] sm:$0xf] %v1773
    // Predicated region
    $region38: #{tpu_custom_call.1} parent=1 // pred_check
      _
    $region39: #{tpu_custom_call.1} parent=1 // pred_check_branch
      %1777 = sbr.rel (0) target = $region41
    $region40: #{tpu_custom_call.1} parent=1 // pred_region
      %1779 = vsyncadd [#allocation7], 0
      %s1780 = sshll.u32 [#allocation11], 4
      %s1781 = int_to_ptr.vmem [resolvable:$true] %s1780
      %s1782 = sshll.u32 %s5, 4
      %s1783 = int_to_ptr.hbm [resolvable:$true] %s1782
      %1788 = dma.vmem_to_hbm [thread:$0]  %s1781, 512, %s1783, [#allocation7], 64, 64, 4
    $region41: #{tpu_custom_call.1} parent=1 // pred_fallthru
      _
    // Predicated region
    $region42: #{tpu_custom_call.1} parent=1 // pred_check
      _
    $region43: #{tpu_custom_call.1} parent=1 // pred_check_branch
      %1790 = sbr.rel (0) target = $region45
    $region44: #{tpu_custom_call.1} parent=1 // pred_region
      %1792 = dma.done [#allocation7], 512
    $region45: #{tpu_custom_call.1} parent=1 // pred_fallthru
      _
    %1793 = vsyncpa [#allocation6], 1
    %1794 = vsyncpa [#allocation9], 1
    %1795 = vsyncpa [#allocation7], 1

</llo_original>
